<compile_context>
chip_gen: v7x
topology: tpu7x:2x2x1
jax: 0.10.0
libtpu: 0.0.40
codegen_flags: <defaults>
</compile_context>

<pallas_src>
import numpy as np
import jax
import jax.numpy as jnp
from jax import lax
from jax.experimental import pallas as pl
from jax.experimental.pallas import tpu as pltpu

_EPS = 1e-5
_H2 = 3          # conv2 output height: (input_ch + 2) - input_ch + 1
_R = 16 * _H2    # activation rows per sample (16 channels x 3 h-rows)


def _rup(x, m):
    return ((x + m - 1) // m) * m


def _dims(num_classes, input_ch, input_time):
    T, ICH = input_time, input_ch
    KW1, PW1 = T // 2, T // 4
    H1P = ICH + 2                 # padded input height == conv1 output height
    H1Pp = _rup(H1P, 8)           # sublane-aligned per-sample input rows
    W1P = T + 2 * PW1             # PyTorch-padded width fed to conv1
    W1 = W1P - KW1 + 1            # conv1 output width
    W3 = W1 // 4                  # width after AvgPool2d((1, 4))
    W1c = 4 * W3                  # conv1/conv2 width cropped to what pool4 reads
    W1cp = _rup(max(W1c, 1), 128)  # lane-aligned per-group conv1 width
    PAD3, KW3 = T // 8, T // 4
    W3P = W3 + 2 * PAD3           # conv3 padded input width
    W4 = W3P - KW3 + 1            # conv3 / conv4 output width
    W5 = W4 // 8                  # width after AvgPool2d((1, 8))
    CW = 256 if (W1cp % 256 == 0) else 128   # conv1 output-chunk width
    n_chunks = W1cp // CW
    CWK = CW + KW1 - 1            # input window width per conv1 chunk
    W1Pe = W1cp + KW1 - 1         # total input width the kernel reads
    return dict(K=num_classes, ICH=ICH, T=T, KW1=KW1, PW1=PW1, H1P=H1P,
                H1Pp=H1Pp, W1P=W1P, W1=W1, W3=W3, W1c=W1c, W1cp=W1cp,
                PAD3=PAD3, KW3=KW3, W3P=W3P, W4=W4, W5=W5,
                CW=CW, n_chunks=n_chunks, CWK=CWK, W1Pe=W1Pe)


def _pack(p, d, B, Bp):
    """Fold eval-mode BatchNorms and repack weights into MXU-friendly layouts."""
    K, ICH = d['K'], d['ICH']
    KW1, KW3 = d['KW1'], d['KW3']
    H1Pp, W1c, W1cp = d['H1Pp'], d['W1c'], d['W1cp']
    W3P, PAD3, W4, W5 = d['W3P'], d['PAD3'], d['W4'], d['W5']
    CW, CWK = d['CW'], d['CWK']

    f = lambda a: np.asarray(a, np.float32)
    w1 = f(p['w1'])[:, 0, 0, :]            # (8, KW1)
    w2 = f(p['w2'])[:, 0, :, 0]            # (16, ICH)
    w3 = f(p['w3'])[:, 0, 0, :]            # (16, KW3)
    w4 = f(p['w4'])[:, :, 0, 0]            # (16, 16)
    b2, b3, b4 = f(p['b2']), f(p['b3']), f(p['b4'])
    a1 = f(p['g1']) / np.sqrt(f(p['v1']) + _EPS)
    a2 = f(p['g2']) / np.sqrt(f(p['v2']) + _EPS)
    a3 = f(p['g3']) / np.sqrt(f(p['v3']) + _EPS)
    sh1 = f(p['be1']) - a1 * f(p['m1'])
    sh2 = f(p['be2']) - a2 * f(p['m2'])
    sh3 = f(p['be3']) - a3 * f(p['m3'])

    # Conv1 (+BN1 scale) as one chunk-shared Toeplitz matrix (CWK, 8*CW):
    # every CW-wide output chunk reuses it against a CWK-wide input window,
    # so the resident weight is independent of input_time.
    t1s = np.zeros((CWK, 8, CW), np.float32)
    taps = (a1[:, None] * w1).T            # (KW1, 8)
    for wl in range(CW):
        t1s[wl:wl + KW1, :, wl] = taps
    t1s = t1s.reshape(CWK, 8 * CW)

    # Grouped Conv2 (ICH,1) + BN2 as a block-sparse (48, 8*H1Pp) matrix,
    # kron-tiled over the batch tile -> single MXU matmul in the kernel.
    w2m = np.zeros((_R, 8, H1Pp), np.float32)
    for o in range(16):
        for h2 in range(_H2):
            w2m[o * _H2 + h2, o // 2, h2:h2 + ICH] = a2[o] * w2[o, :]
    w2m = w2m.reshape(_R, 8 * H1Pp)
    w2bd = np.kron(np.eye(B, dtype=np.float32), w2m)          # (B*48, B*8*H1Pp)

    # Conv2 bias + BN2 shift + (BN1 shift pushed through conv2) per row.
    s2 = np.repeat(a2 * (b2 + sh1[np.arange(16) // 2] * w2.sum(1)) + sh2, _H2)
    s2bd = np.tile(s2, B)[:, None]                            # (B*48, 1)

    # AvgPool(1,4) (floor crop) + conv3 zero padding folded into one matrix.
    p4 = np.zeros((W1cp, W3P), np.float32)
    p4[np.arange(W1c), PAD3 + np.arange(W1c) // 4] = 0.25

    # Depthwise conv3 taps / bias per activation row, tiled over the tile.
    w3bd = np.tile(np.repeat(w3, _H2, axis=0), (B, 1))        # (B*48, KW3)
    c3bd = np.tile(np.repeat(b3, _H2), B)[:, None]            # (B*48, 1)

    # 1x1 Conv4 + BN3 scale as a (48, 48) channel-mixing matrix, kron-tiled.
    m4 = np.kron(a3[:, None] * w4, np.eye(_H2, dtype=np.float32))
    m4bd = np.kron(np.eye(B, dtype=np.float32), m4)           # (B*48, B*48)
    b3bd = np.tile(np.repeat(a3 * b4 + sh3, _H2), B)[:, None]

    # Classifier with AvgPool(1,8) + flatten folded in: per-class Frobenius
    # weights over the (48, W4) per-sample activation block.
    wfc = f(p['wfc']).reshape(K, 16, _H2, W5)
    wc = np.zeros((K, _R, W4), np.float32)
    for w5 in range(W5):
        wc[:, :, 8 * w5:8 * w5 + 8] = wfc[:, :, :, w5].reshape(K, _R, 1) / 8.0
    wcb = np.tile(wc, (1, B, 1))                              # (K, B*48, W4)

    smat = np.zeros((Bp, B * _R), np.float32)                 # per-sample row sum
    for b in range(B):
        smat[b, b * _R:(b + 1) * _R] = 1.0
    bfc = f(p['bfc'])[None, :]                                # (1, K)

    packed = (t1s, w2bd, s2bd, p4, w3bd, c3bd, m4bd, b3bd, wcb, smat, bfc)
    return tuple(jnp.asarray(np.asarray(a, np.float32)) for a in packed)


def shallow_convnet_forward(x, p, num_classes, input_ch, input_time,
                            b_tile=None):
    """x: (N, 1, input_ch, input_time) float32 -> (N, num_classes) float32."""
    d = _dims(num_classes, input_ch, input_time)
    K = d['K']
    assert K <= 128, "num_classes > 128 not supported by the padded output tile"
    ICH, T, PW1 = d['ICH'], d['T'], d['PW1']
    H1Pp, W1Pe, W1cp = d['H1Pp'], d['W1Pe'], d['W1cp']
    W3P, KW3, W4 = d['W3P'], d['KW3'], d['W4']
    CW, CWK, n_chunks = d['CW'], d['CWK'], d['n_chunks']

    N = x.shape[0]
    if b_tile is None:
        # Aim for ~128 MXU rows on the conv1 matmul (B * H1Pp).
        B = max(1, min(N, -(-128 // H1Pp)))
    else:
        B = max(1, min(int(b_tile), N))
    G = -(-N // B)                # cdiv(N, B): number of (parallel) grid steps
    Npad = G * B
    Bp = _rup(B, 8)               # sublane-padded rows of the output block
    RB = B * _R                   # activation rows per batch tile

    weights = _pack(p, d, B, Bp)
    (t1s, w2bd, s2bd, p4m, w3bd, c3bd, m4bd, b3bd, wcb, smat, bfc) = weights

    # Glue: conv1 padding (height 1, width PW1) + sublane/chunk-window zero
    # padding, presented as one lane-dense (B*H1Pp, W1Pe) slab per grid step.
    xs = x[:, 0].astype(jnp.float32)
    xp = jnp.pad(xs, ((0, Npad - N), (1, H1Pp - 1 - ICH), (PW1, 0)))
    wpad = W1Pe - (PW1 + T)
    if wpad >= 0:
        xp = jnp.pad(xp, ((0, 0), (0, 0), (0, wpad)))
    else:
        xp = xp[:, :, :W1Pe]
    x3d = xp.reshape(G, B * H1Pp, W1Pe)

    def kernel(x_ref, t1_ref, w2_ref, s2_ref, p4_ref, w3_ref, c3_ref,
               m4_ref, b3_ref, wcb_ref, sm_ref, bfc_ref, o_ref, y1r):
        f32 = jnp.float32

        def elu(v):  # PyTorch ELU(alpha=1), overflow-safe
            return jnp.where(v > 0, v, jnp.exp(jnp.minimum(v, 0.0)) - 1.0)

        # --- Conv2d(1,8,(1,KW1),bias=False) + BN1 scale: chunked Toeplitz MXU
        # matmuls, scattered (aligned block copies) into (sample, group, h)-
        # major rows of the VMEM scratch for the conv2 matmul.
        xall = x_ref[0]                                       # (B*H1Pp, W1Pe)
        for c in range(n_chunks):
            xc = xall[:, c * CW:c * CW + CWK]
            yc = jnp.dot(xc, t1_ref[...], preferred_element_type=f32)
            for b in range(B):
                for g in range(8):
                    y1r[(b * 8 + g) * H1Pp:(b * 8 + g + 1) * H1Pp,
                        c * CW:(c + 1) * CW] = \
                        yc[b * H1Pp:(b + 1) * H1Pp, g * CW:(g + 1) * CW]

        # --- Conv2d(8,16,(ICH,1),groups=8) + BN2 + ELU: one block-diagonal
        # MXU matmul over the whole batch tile (BN1 shift folded into s2).
        y2 = elu(jnp.dot(w2_ref[...], y1r[...], preferred_element_type=f32)
                 + s2_ref[...])                               # (B*48, W1cp)

        # --- AvgPool2d((1,4)) + floor crop + conv3 zero padding: one matmul.
        y3 = jnp.dot(y2, p4_ref[...], preferred_element_type=f32)  # (B*48, W3P)

        # --- Conv2d(16,16,(1,KW3),groups=16) + bias: batched depthwise taps.
        w3v = w3_ref[...]
        if KW3 <= 32:
            acc = jnp.zeros((RB, W4), f32)
            for k in range(KW3):
                acc = acc + w3v[:, k:k + 1] * y3[:, k:k + W4]
        else:
            # Bound code size for realistic input_time (KW3 in the hundreds).
            def tap(k, a):
                t = lax.dynamic_slice(w3v, (0, k), (RB, 1))
                win = lax.dynamic_slice(y3, (0, k), (RB, W4))
                return a + t * win
            acc = lax.fori_loop(0, KW3, tap, jnp.zeros((RB, W4), f32),
                                unroll=4)
        y4 = acc + c3_ref[...]                                # (B*48, W4)

        # --- Conv2d(16,16,(1,1)) + BN3 + ELU: one block-diagonal MXU matmul.
        y5 = elu(jnp.dot(m4_ref[...], y4, preferred_element_type=f32)
                 + b3_ref[...])                               # (B*48, W4)

        # --- AvgPool2d((1,8)) + flatten + Linear: pool folded into per-class
        # Frobenius weights, then one tiny per-sample row-sum matmul.
        cols = [jnp.sum(y5 * wcb_ref[k], axis=1, keepdims=True)
                for k in range(K)]
        colcat = jnp.concatenate(cols, axis=1) if K > 1 else cols[0]
        out = jnp.dot(sm_ref[...], colcat,
                      preferred_element_type=f32) + bfc_ref[...]   # (Bp, K)
        if K < 128:
            out = jnp.concatenate(
                [out, jnp.zeros((Bp, 128 - K), f32)], axis=1)
        o_ref[0] = out                                        # lane-dense store

    def _cmap(nd):
        return lambda n: (0,) * nd

    in_specs = [pl.BlockSpec((1, B * H1Pp, W1Pe), lambda n: (n, 0, 0))]
    in_specs += [pl.BlockSpec(w.shape, _cmap(w.ndim)) for w in weights]

    out = pl.pallas_call(
        kernel,
        out_shape=jax.ShapeDtypeStruct((G, Bp, 128), jnp.float32),
        grid_spec=pltpu.PrefetchScalarGridSpec(
            num_scalar_prefetch=0,
            grid=(G,),
            in_specs=in_specs,
            out_specs=pl.BlockSpec((1, Bp, 128), lambda n: (n, 0, 0)),
            scratch_shapes=[pltpu.VMEM((B * 8 * H1Pp, W1cp), jnp.float32)]),
        compiler_params=pltpu.CompilerParams(
            dimension_semantics=("parallel",)),
    )(x3d, *weights)
    return out[:, :B, :K].reshape(G * B, K)[:N]


def init_params(key, num_classes, input_ch, input_time):
    """Deterministic synthetic parameters in the PyTorch layout."""
    d = _dims(num_classes, input_ch, input_time)
    ICH, K = d['ICH'], d['K']
    KW1, KW3, W5 = d['KW1'], d['KW3'], d['W5']

    keys = iter(jax.random.split(key, 24))
    nrm = lambda shape, s=0.3: s * jax.random.normal(next(keys), shape, jnp.float32)
    uni = lambda shape: jax.random.uniform(next(keys), shape, jnp.float32, 0.5, 1.5)

    p = {}
    p['w1'] = nrm((8, 1, 1, KW1))
    p['g1'], p['be1'], p['m1'], p['v1'] = 1.0 + nrm((8,), 0.1), nrm((8,), 0.1), nrm((8,), 0.1), uni((8,))
    p['w2'], p['b2'] = nrm((16, 1, ICH, 1)), nrm((16,), 0.1)
    p['g2'], p['be2'], p['m2'], p['v2'] = 1.0 + nrm((16,), 0.1), nrm((16,), 0.1), nrm((16,), 0.1), uni((16,))
    p['w3'], p['b3'] = nrm((16, 1, 1, KW3)), nrm((16,), 0.1)
    p['w4'], p['b4'] = nrm((16, 16, 1, 1)), nrm((16,), 0.1)
    p['g3'], p['be3'], p['m3'], p['v3'] = 1.0 + nrm((16,), 0.1), nrm((16,), 0.1), nrm((16,), 0.1), uni((16,))
    n_outputs = 16 * _H2 * W5
    p['wfc'], p['bfc'] = nrm((K, n_outputs), 0.2), nrm((K,), 0.1)
    return p


def reference_forward(x, p, num_classes, input_ch, input_time):
    """Plain-JAX (XLA) reference of the PyTorch forward in eval mode."""
    dn = ('NCHW', 'OIHW', 'NCHW')
    hp = lax.Precision.HIGHEST
    T = input_time

    def bn(y, g, b, m, v):
        sh = (1, -1, 1, 1)
        return (y - m.reshape(sh)) / jnp.sqrt(v.reshape(sh) + _EPS) * g.reshape(sh) + b.reshape(sh)

    def avgpool_w(y, k):
        Wo = y.shape[-1] // k
        return y[..., :Wo * k].reshape(y.shape[:-1] + (Wo, k)).mean(-1)

    y = lax.conv_general_dilated(x, p['w1'], (1, 1), [(1, 1), (T // 4, T // 4)],
                                 dimension_numbers=dn, precision=hp)
    y = bn(y, p['g1'], p['be1'], p['m1'], p['v1'])
    y = lax.conv_general_dilated(y, p['w2'], (1, 1), [(0, 0), (0, 0)],
                                 dimension_numbers=dn, feature_group_count=8,
                                 precision=hp) + p['b2'].reshape(1, -1, 1, 1)
    y = jax.nn.elu(bn(y, p['g2'], p['be2'], p['m2'], p['v2']))
    y = avgpool_w(y, 4)
    y = lax.conv_general_dilated(y, p['w3'], (1, 1), [(0, 0), (T // 8, T // 8)],
                                 dimension_numbers=dn, feature_group_count=16,
                                 precision=hp) + p['b3'].reshape(1, -1, 1, 1)
    y = lax.conv_general_dilated(y, p['w4'], (1, 1), [(0, 0), (0, 0)],
                                 dimension_numbers=dn, precision=hp) + p['b4'].reshape(1, -1, 1, 1)
    y = jax.nn.elu(bn(y, p['g3'], p['be3'], p['m3'], p['v3']))
    y = avgpool_w(y, 8)
    flat = y.reshape(y.shape[0], -1)
    return jnp.dot(flat, p['wfc'].T, precision=hp) + p['bfc']


if __name__ == "__main__":
    num_classes, input_ch, input_time = 3, 4, 32
    batch = 2

    key = jax.random.PRNGKey(0)
    kx, kp = jax.random.split(key)
    x = jax.random.normal(kx, (batch, 1, input_ch, input_time), jnp.float32)

    params = init_params(kp, num_classes, input_ch, input_time)

    out = shallow_convnet_forward(x, params, num_classes, input_ch, input_time)
    out = jax.block_until_ready(out)
    assert out.shape == (batch, num_classes)

    ref = reference_forward(x, params, num_classes, input_ch, input_time)
    np.testing.assert_allclose(np.asarray(out), np.asarray(ref),
                               rtol=2e-3, atol=2e-3)

    print("KERNEL_OK")
</pallas_src>

<mosaic_0001>
module attributes {stable_mosaic.version = 11 : i64} {
  func.func @kernel(%arg0: i32, %arg1: memref<1x16x143xf32, #tpu.memory_space<vmem>>, %arg2: memref<143x1024xf32, #tpu.memory_space<vmem>>, %arg3: memref<96x128xf32, #tpu.memory_space<vmem>>, %arg4: memref<96x1xf32, #tpu.memory_space<vmem>>, %arg5: memref<128x16xf32, #tpu.memory_space<vmem>>, %arg6: memref<96x8xf32, #tpu.memory_space<vmem>>, %arg7: memref<96x1xf32, #tpu.memory_space<vmem>>, %arg8: memref<96x96xf32, #tpu.memory_space<vmem>>, %arg9: memref<96x1xf32, #tpu.memory_space<vmem>>, %arg10: memref<3x96x9xf32, #tpu.memory_space<vmem>>, %arg11: memref<8x96xf32, #tpu.memory_space<vmem>>, %arg12: memref<1x3xf32, #tpu.memory_space<vmem>>, %arg13: memref<1x8x128xf32, #tpu.memory_space<vmem>>, %arg14: memref<128x128xf32, #tpu.memory_space<vmem>>) attributes {dimension_semantics = [#tpu.dimension_semantics<parallel>], iteration_bounds = array<i64: 1>, scalar_prefetch = 0 : i64, scratch_operands = 1 : i64, tpu.core_type = #tpu.core_type<tc>, window_params = [{transform_indices = @transform_0, window_bounds = array<i64: 1, 16, 143>}, {pipeline_mode = #tpu.pipeline_mode<synchronous>, transform_indices = @transform_1, window_bounds = array<i64: 143, 1024>}, {pipeline_mode = #tpu.pipeline_mode<synchronous>, transform_indices = @transform_2, window_bounds = array<i64: 96, 128>}, {pipeline_mode = #tpu.pipeline_mode<synchronous>, transform_indices = @transform_3, window_bounds = array<i64: 96, 1>}, {pipeline_mode = #tpu.pipeline_mode<synchronous>, transform_indices = @transform_4, window_bounds = array<i64: 128, 16>}, {pipeline_mode = #tpu.pipeline_mode<synchronous>, transform_indices = @transform_5, window_bounds = array<i64: 96, 8>}, {pipeline_mode = #tpu.pipeline_mode<synchronous>, transform_indices = @transform_6, window_bounds = array<i64: 96, 1>}, {pipeline_mode = #tpu.pipeline_mode<synchronous>, transform_indices = @transform_7, window_bounds = array<i64: 96, 96>}, {pipeline_mode = #tpu.pipeline_mode<synchronous>, transform_indices = @transform_8, window_bounds = array<i64: 96, 1>}, {pipeline_mode = #tpu.pipeline_mode<synchronous>, transform_indices = @transform_9, window_bounds = array<i64: 3, 96, 9>}, {pipeline_mode = #tpu.pipeline_mode<synchronous>, transform_indices = @transform_10, window_bounds = array<i64: 8, 96>}, {pipeline_mode = #tpu.pipeline_mode<synchronous>, transform_indices = @transform_11, window_bounds = array<i64: 1, 3>}, {transform_indices = @transform_12, window_bounds = array<i64: 1, 8, 128>}]} {
    %c0 = arith.constant 0 : index
    %c0_0 = arith.constant 0 : index
    %c0_1 = arith.constant 0 : index
    %0 = vector.load %arg1[%c0, %c0_0, %c0_1] : memref<1x16x143xf32, #tpu.memory_space<vmem>>, vector<1x16x143xf32>
    %1 = vector.shape_cast %0 : vector<1x16x143xf32> to vector<16x143xf32>
    %c0_2 = arith.constant 0 : index
    %c0_3 = arith.constant 0 : index
    %2 = vector.load %arg2[%c0_2, %c0_3] : memref<143x1024xf32, #tpu.memory_space<vmem>>, vector<143x1024xf32>
    %cst = arith.constant dense<0.000000e+00> : vector<16x1024xf32>
    %3 = tpu.matmul %1, %2, %cst {dimension_numbers = #tpu.dot_dimension_numbers<[1], [0], [0], [1], [0, 0, 1, 1], [], []>} : vector<16x143xf32>, vector<143x1024xf32>, vector<16x1024xf32> -> vector<16x1024xf32>
    %4 = vector.extract_strided_slice %3 {offsets = [0, 0], sizes = [8, 128], strides = [1, 1]} : vector<16x1024xf32> to vector<8x128xf32>
    %c0_4 = arith.constant 0 : index
    %c0_5 = arith.constant 0 : index
    %5 = vector.load %arg14[%c0_4, %c0_5] : memref<128x128xf32, #tpu.memory_space<vmem>>, vector<8x128xf32>
    tpu.vector_store %arg14[%c0_4, %c0_5], %4 {strides = array<i32>} : memref<128x128xf32, #tpu.memory_space<vmem>>, vector<8x128xf32>,
    %6 = vector.extract_strided_slice %3 {offsets = [0, 128], sizes = [8, 128], strides = [1, 1]} : vector<16x1024xf32> to vector<8x128xf32>
    %c8 = arith.constant 8 : index
    %c0_6 = arith.constant 0 : index
    %7 = vector.load %arg14[%c8, %c0_6] : memref<128x128xf32, #tpu.memory_space<vmem>>, vector<8x128xf32>
    tpu.vector_store %arg14[%c8, %c0_6], %6 {strides = array<i32>} : memref<128x128xf32, #tpu.memory_space<vmem>>, vector<8x128xf32>,
    %8 = vector.extract_strided_slice %3 {offsets = [0, 256], sizes = [8, 128], strides = [1, 1]} : vector<16x1024xf32> to vector<8x128xf32>
    %c16 = arith.constant 16 : index
    %c0_7 = arith.constant 0 : index
    %9 = vector.load %arg14[%c16, %c0_7] : memref<128x128xf32, #tpu.memory_space<vmem>>, vector<8x128xf32>
    tpu.vector_store %arg14[%c16, %c0_7], %8 {strides = array<i32>} : memref<128x128xf32, #tpu.memory_space<vmem>>, vector<8x128xf32>,
    %10 = vector.extract_strided_slice %3 {offsets = [0, 384], sizes = [8, 128], strides = [1, 1]} : vector<16x1024xf32> to vector<8x128xf32>
    %c24 = arith.constant 24 : index
    %c0_8 = arith.constant 0 : index
    %11 = vector.load %arg14[%c24, %c0_8] : memref<128x128xf32, #tpu.memory_space<vmem>>, vector<8x128xf32>
    tpu.vector_store %arg14[%c24, %c0_8], %10 {strides = array<i32>} : memref<128x128xf32, #tpu.memory_space<vmem>>, vector<8x128xf32>,
    %12 = vector.extract_strided_slice %3 {offsets = [0, 512], sizes = [8, 128], strides = [1, 1]} : vector<16x1024xf32> to vector<8x128xf32>
    %c32 = arith.constant 32 : index
    %c0_9 = arith.constant 0 : index
    %13 = vector.load %arg14[%c32, %c0_9] : memref<128x128xf32, #tpu.memory_space<vmem>>, vector<8x128xf32>
    tpu.vector_store %arg14[%c32, %c0_9], %12 {strides = array<i32>} : memref<128x128xf32, #tpu.memory_space<vmem>>, vector<8x128xf32>,
    %14 = vector.extract_strided_slice %3 {offsets = [0, 640], sizes = [8, 128], strides = [1, 1]} : vector<16x1024xf32> to vector<8x128xf32>
    %c40 = arith.constant 40 : index
    %c0_10 = arith.constant 0 : index
    %15 = vector.load %arg14[%c40, %c0_10] : memref<128x128xf32, #tpu.memory_space<vmem>>, vector<8x128xf32>
    tpu.vector_store %arg14[%c40, %c0_10], %14 {strides = array<i32>} : memref<128x128xf32, #tpu.memory_space<vmem>>, vector<8x128xf32>,
    %16 = vector.extract_strided_slice %3 {offsets = [0, 768], sizes = [8, 128], strides = [1, 1]} : vector<16x1024xf32> to vector<8x128xf32>
    %c48 = arith.constant 48 : index
    %c0_11 = arith.constant 0 : index
    %17 = vector.load %arg14[%c48, %c0_11] : memref<128x128xf32, #tpu.memory_space<vmem>>, vector<8x128xf32>
    tpu.vector_store %arg14[%c48, %c0_11], %16 {strides = array<i32>} : memref<128x128xf32, #tpu.memory_space<vmem>>, vector<8x128xf32>,
    %18 = vector.extract_strided_slice %3 {offsets = [0, 896], sizes = [8, 128], strides = [1, 1]} : vector<16x1024xf32> to vector<8x128xf32>
    %c56 = arith.constant 56 : index
    %c0_12 = arith.constant 0 : index
    %19 = vector.load %arg14[%c56, %c0_12] : memref<128x128xf32, #tpu.memory_space<vmem>>, vector<8x128xf32>
    tpu.vector_store %arg14[%c56, %c0_12], %18 {strides = array<i32>} : memref<128x128xf32, #tpu.memory_space<vmem>>, vector<8x128xf32>,
    %20 = vector.extract_strided_slice %3 {offsets = [8, 0], sizes = [8, 128], strides = [1, 1]} : vector<16x1024xf32> to vector<8x128xf32>
    %c64 = arith.constant 64 : index
    %c0_13 = arith.constant 0 : index
    %21 = vector.load %arg14[%c64, %c0_13] : memref<128x128xf32, #tpu.memory_space<vmem>>, vector<8x128xf32>
    tpu.vector_store %arg14[%c64, %c0_13], %20 {strides = array<i32>} : memref<128x128xf32, #tpu.memory_space<vmem>>, vector<8x128xf32>,
    %22 = vector.extract_strided_slice %3 {offsets = [8, 128], sizes = [8, 128], strides = [1, 1]} : vector<16x1024xf32> to vector<8x128xf32>
    %c72 = arith.constant 72 : index
    %c0_14 = arith.constant 0 : index
    %23 = vector.load %arg14[%c72, %c0_14] : memref<128x128xf32, #tpu.memory_space<vmem>>, vector<8x128xf32>
    tpu.vector_store %arg14[%c72, %c0_14], %22 {strides = array<i32>} : memref<128x128xf32, #tpu.memory_space<vmem>>, vector<8x128xf32>,
    %24 = vector.extract_strided_slice %3 {offsets = [8, 256], sizes = [8, 128], strides = [1, 1]} : vector<16x1024xf32> to vector<8x128xf32>
    %c80 = arith.constant 80 : index
    %c0_15 = arith.constant 0 : index
    %25 = vector.load %arg14[%c80, %c0_15] : memref<128x128xf32, #tpu.memory_space<vmem>>, vector<8x128xf32>
    tpu.vector_store %arg14[%c80, %c0_15], %24 {strides = array<i32>} : memref<128x128xf32, #tpu.memory_space<vmem>>, vector<8x128xf32>,
    %26 = vector.extract_strided_slice %3 {offsets = [8, 384], sizes = [8, 128], strides = [1, 1]} : vector<16x1024xf32> to vector<8x128xf32>
    %c88 = arith.constant 88 : index
    %c0_16 = arith.constant 0 : index
    %27 = vector.load %arg14[%c88, %c0_16] : memref<128x128xf32, #tpu.memory_space<vmem>>, vector<8x128xf32>
    tpu.vector_store %arg14[%c88, %c0_16], %26 {strides = array<i32>} : memref<128x128xf32, #tpu.memory_space<vmem>>, vector<8x128xf32>,
    %28 = vector.extract_strided_slice %3 {offsets = [8, 512], sizes = [8, 128], strides = [1, 1]} : vector<16x1024xf32> to vector<8x128xf32>
    %c96 = arith.constant 96 : index
    %c0_17 = arith.constant 0 : index
    %29 = vector.load %arg14[%c96, %c0_17] : memref<128x128xf32, #tpu.memory_space<vmem>>, vector<8x128xf32>
    tpu.vector_store %arg14[%c96, %c0_17], %28 {strides = array<i32>} : memref<128x128xf32, #tpu.memory_space<vmem>>, vector<8x128xf32>,
    %30 = vector.extract_strided_slice %3 {offsets = [8, 640], sizes = [8, 128], strides = [1, 1]} : vector<16x1024xf32> to vector<8x128xf32>
    %c104 = arith.constant 104 : index
    %c0_18 = arith.constant 0 : index
    %31 = vector.load %arg14[%c104, %c0_18] : memref<128x128xf32, #tpu.memory_space<vmem>>, vector<8x128xf32>
    tpu.vector_store %arg14[%c104, %c0_18], %30 {strides = array<i32>} : memref<128x128xf32, #tpu.memory_space<vmem>>, vector<8x128xf32>,
    %32 = vector.extract_strided_slice %3 {offsets = [8, 768], sizes = [8, 128], strides = [1, 1]} : vector<16x1024xf32> to vector<8x128xf32>
    %c112 = arith.constant 112 : index
    %c0_19 = arith.constant 0 : index
    %33 = vector.load %arg14[%c112, %c0_19] : memref<128x128xf32, #tpu.memory_space<vmem>>, vector<8x128xf32>
    tpu.vector_store %arg14[%c112, %c0_19], %32 {strides = array<i32>} : memref<128x128xf32, #tpu.memory_space<vmem>>, vector<8x128xf32>,
    %34 = vector.extract_strided_slice %3 {offsets = [8, 896], sizes = [8, 128], strides = [1, 1]} : vector<16x1024xf32> to vector<8x128xf32>
    %c120 = arith.constant 120 : index
    %c0_20 = arith.constant 0 : index
    %35 = vector.load %arg14[%c120, %c0_20] : memref<128x128xf32, #tpu.memory_space<vmem>>, vector<8x128xf32>
    tpu.vector_store %arg14[%c120, %c0_20], %34 {strides = array<i32>} : memref<128x128xf32, #tpu.memory_space<vmem>>, vector<8x128xf32>,
    %c0_21 = arith.constant 0 : index
    %c0_22 = arith.constant 0 : index
    %36 = vector.load %arg3[%c0_21, %c0_22] : memref<96x128xf32, #tpu.memory_space<vmem>>, vector<96x128xf32>
    %c0_23 = arith.constant 0 : index
    %c0_24 = arith.constant 0 : index
    %37 = vector.load %arg14[%c0_23, %c0_24] : memref<128x128xf32, #tpu.memory_space<vmem>>, vector<128x128xf32>
    %cst_25 = arith.constant dense<0.000000e+00> : vector<96x128xf32>
    %38 = tpu.matmul %36, %37, %cst_25 {dimension_numbers = #tpu.dot_dimension_numbers<[1], [0], [0], [1], [0, 0, 1, 1], [], []>} : vector<96x128xf32>, vector<128x128xf32>, vector<96x128xf32> -> vector<96x128xf32>
    %c0_26 = arith.constant 0 : index
    %c0_27 = arith.constant 0 : index
    %39 = vector.load %arg4[%c0_26, %c0_27] : memref<96x1xf32, #tpu.memory_space<vmem>>, vector<96x1xf32>
    %40 = vector.broadcast %39 : vector<96x1xf32> to vector<96x128xf32>
    %41 = arith.addf %38, %40 : vector<96x128xf32>
    %cst_28 = arith.constant 0.000000e+00 : f32
    %42 = vector.broadcast %cst_28 : f32 to vector<96x128xf32>
    %43 = arith.cmpf ogt, %41, %42 : vector<96x128xf32>
    %cst_29 = arith.constant 0.000000e+00 : f32
    %44 = vector.broadcast %cst_29 : f32 to vector<96x128xf32>
    %45 = arith.minimumf %41, %44 : vector<96x128xf32>
    %46 = math.exp %45 : vector<96x128xf32>
    %cst_30 = arith.constant 1.000000e+00 : f32
    %47 = vector.broadcast %cst_30 : f32 to vector<96x128xf32>
    %48 = arith.subf %46, %47 : vector<96x128xf32>
    %49 = arith.select %43, %41, %48 : vector<96x128xi1>, vector<96x128xf32>
    %c0_31 = arith.constant 0 : index
    %c0_32 = arith.constant 0 : index
    %50 = vector.load %arg5[%c0_31, %c0_32] : memref<128x16xf32, #tpu.memory_space<vmem>>, vector<128x16xf32>
    %cst_33 = arith.constant dense<0.000000e+00> : vector<96x16xf32>
    %51 = tpu.matmul %49, %50, %cst_33 {dimension_numbers = #tpu.dot_dimension_numbers<[1], [0], [0], [1], [0, 0, 1, 1], [], []>} : vector<96x128xf32>, vector<128x16xf32>, vector<96x16xf32> -> vector<96x16xf32>
    %c0_34 = arith.constant 0 : index
    %c0_35 = arith.constant 0 : index
    %52 = vector.load %arg6[%c0_34, %c0_35] : memref<96x8xf32, #tpu.memory_space<vmem>>, vector<96x8xf32>
    %cst_36 = arith.constant 0.000000e+00 : f32
    %53 = vector.broadcast %cst_36 : f32 to vector<96x9xf32>
    %54 = vector.extract_strided_slice %52 {offsets = [0, 0], sizes = [96, 1], strides = [1, 1]} : vector<96x8xf32> to vector<96x1xf32>
    %55 = vector.extract_strided_slice %51 {offsets = [0, 0], sizes = [96, 9], strides = [1, 1]} : vector<96x16xf32> to vector<96x9xf32>
    %56 = vector.broadcast %54 : vector<96x1xf32> to vector<96x9xf32>
    %57 = arith.mulf %56, %55 : vector<96x9xf32>
    %58 = arith.addf %53, %57 : vector<96x9xf32>
    %59 = vector.extract_strided_slice %52 {offsets = [0, 1], sizes = [96, 1], strides = [1, 1]} : vector<96x8xf32> to vector<96x1xf32>
    %60 = vector.extract_strided_slice %51 {offsets = [0, 1], sizes = [96, 9], strides = [1, 1]} : vector<96x16xf32> to vector<96x9xf32>
    %61 = vector.broadcast %59 : vector<96x1xf32> to vector<96x9xf32>
    %62 = arith.mulf %61, %60 : vector<96x9xf32>
    %63 = arith.addf %58, %62 : vector<96x9xf32>
    %64 = vector.extract_strided_slice %52 {offsets = [0, 2], sizes = [96, 1], strides = [1, 1]} : vector<96x8xf32> to vector<96x1xf32>
    %65 = vector.extract_strided_slice %51 {offsets = [0, 2], sizes = [96, 9], strides = [1, 1]} : vector<96x16xf32> to vector<96x9xf32>
    %66 = vector.broadcast %64 : vector<96x1xf32> to vector<96x9xf32>
    %67 = arith.mulf %66, %65 : vector<96x9xf32>
    %68 = arith.addf %63, %67 : vector<96x9xf32>
    %69 = vector.extract_strided_slice %52 {offsets = [0, 3], sizes = [96, 1], strides = [1, 1]} : vector<96x8xf32> to vector<96x1xf32>
    %70 = vector.extract_strided_slice %51 {offsets = [0, 3], sizes = [96, 9], strides = [1, 1]} : vector<96x16xf32> to vector<96x9xf32>
    %71 = vector.broadcast %69 : vector<96x1xf32> to vector<96x9xf32>
    %72 = arith.mulf %71, %70 : vector<96x9xf32>
    %73 = arith.addf %68, %72 : vector<96x9xf32>
    %74 = vector.extract_strided_slice %52 {offsets = [0, 4], sizes = [96, 1], strides = [1, 1]} : vector<96x8xf32> to vector<96x1xf32>
    %75 = vector.extract_strided_slice %51 {offsets = [0, 4], sizes = [96, 9], strides = [1, 1]} : vector<96x16xf32> to vector<96x9xf32>
    %76 = vector.broadcast %74 : vector<96x1xf32> to vector<96x9xf32>
    %77 = arith.mulf %76, %75 : vector<96x9xf32>
    %78 = arith.addf %73, %77 : vector<96x9xf32>
    %79 = vector.extract_strided_slice %52 {offsets = [0, 5], sizes = [96, 1], strides = [1, 1]} : vector<96x8xf32> to vector<96x1xf32>
    %80 = vector.extract_strided_slice %51 {offsets = [0, 5], sizes = [96, 9], strides = [1, 1]} : vector<96x16xf32> to vector<96x9xf32>
    %81 = vector.broadcast %79 : vector<96x1xf32> to vector<96x9xf32>
    %82 = arith.mulf %81, %80 : vector<96x9xf32>
    %83 = arith.addf %78, %82 : vector<96x9xf32>
    %84 = vector.extract_strided_slice %52 {offsets = [0, 6], sizes = [96, 1], strides = [1, 1]} : vector<96x8xf32> to vector<96x1xf32>
    %85 = vector.extract_strided_slice %51 {offsets = [0, 6], sizes = [96, 9], strides = [1, 1]} : vector<96x16xf32> to vector<96x9xf32>
    %86 = vector.broadcast %84 : vector<96x1xf32> to vector<96x9xf32>
    %87 = arith.mulf %86, %85 : vector<96x9xf32>
    %88 = arith.addf %83, %87 : vector<96x9xf32>
    %89 = vector.extract_strided_slice %52 {offsets = [0, 7], sizes = [96, 1], strides = [1, 1]} : vector<96x8xf32> to vector<96x1xf32>
    %90 = vector.extract_strided_slice %51 {offsets = [0, 7], sizes = [96, 9], strides = [1, 1]} : vector<96x16xf32> to vector<96x9xf32>
    %91 = vector.broadcast %89 : vector<96x1xf32> to vector<96x9xf32>
    %92 = arith.mulf %91, %90 : vector<96x9xf32>
    %93 = arith.addf %88, %92 : vector<96x9xf32>
    %c0_37 = arith.constant 0 : index
    %c0_38 = arith.constant 0 : index
    %94 = vector.load %arg7[%c0_37, %c0_38] : memref<96x1xf32, #tpu.memory_space<vmem>>, vector<96x1xf32>
    %95 = vector.broadcast %94 : vector<96x1xf32> to vector<96x9xf32>
    %96 = arith.addf %93, %95 : vector<96x9xf32>
    %c0_39 = arith.constant 0 : index
    %c0_40 = arith.constant 0 : index
    %97 = vector.load %arg8[%c0_39, %c0_40] : memref<96x96xf32, #tpu.memory_space<vmem>>, vector<96x96xf32>
    %cst_41 = arith.constant dense<0.000000e+00> : vector<96x9xf32>
    %98 = tpu.matmul %97, %96, %cst_41 {dimension_numbers = #tpu.dot_dimension_numbers<[1], [0], [0], [1], [0, 0, 1, 1], [], []>} : vector<96x96xf32>, vector<96x9xf32>, vector<96x9xf32> -> vector<96x9xf32>
    %c0_42 = arith.constant 0 : index
    %c0_43 = arith.constant 0 : index
    %99 = vector.load %arg9[%c0_42, %c0_43] : memref<96x1xf32, #tpu.memory_space<vmem>>, vector<96x1xf32>
    %100 = vector.broadcast %99 : vector<96x1xf32> to vector<96x9xf32>
    %101 = arith.addf %98, %100 : vector<96x9xf32>
    %cst_44 = arith.constant 0.000000e+00 : f32
    %102 = vector.broadcast %cst_44 : f32 to vector<96x9xf32>
    %103 = arith.cmpf ogt, %101, %102 : vector<96x9xf32>
    %cst_45 = arith.constant 0.000000e+00 : f32
    %104 = vector.broadcast %cst_45 : f32 to vector<96x9xf32>
    %105 = arith.minimumf %101, %104 : vector<96x9xf32>
    %106 = math.exp %105 : vector<96x9xf32>
    %cst_46 = arith.constant 1.000000e+00 : f32
    %107 = vector.broadcast %cst_46 : f32 to vector<96x9xf32>
    %108 = arith.subf %106, %107 : vector<96x9xf32>
    %109 = arith.select %103, %101, %108 : vector<96x9xi1>, vector<96x9xf32>
    %c0_47 = arith.constant 0 : index
    %c0_48 = arith.constant 0 : index
    %c0_49 = arith.constant 0 : index
    %110 = vector.load %arg10[%c0_47, %c0_48, %c0_49] : memref<3x96x9xf32, #tpu.memory_space<vmem>>, vector<1x96x9xf32>
    %111 = vector.shape_cast %110 : vector<1x96x9xf32> to vector<96x9xf32>
    %112 = arith.mulf %109, %111 : vector<96x9xf32>
    %cst_50 = arith.constant dense<0.000000e+00> : vector<96xf32>
    %113 = vector.multi_reduction <add>, %112, %cst_50 [1] : vector<96x9xf32> to vector<96xf32>
    %114 = vector.shape_cast %113 : vector<96xf32> to vector<96x1xf32>
    %c1 = arith.constant 1 : index
    %c0_51 = arith.constant 0 : index
    %c0_52 = arith.constant 0 : index
    %115 = vector.load %arg10[%c1, %c0_51, %c0_52] : memref<3x96x9xf32, #tpu.memory_space<vmem>>, vector<1x96x9xf32>
    %116 = vector.shape_cast %115 : vector<1x96x9xf32> to vector<96x9xf32>
    %117 = arith.mulf %109, %116 : vector<96x9xf32>
    %cst_53 = arith.constant dense<0.000000e+00> : vector<96xf32>
    %118 = vector.multi_reduction <add>, %117, %cst_53 [1] : vector<96x9xf32> to vector<96xf32>
    %119 = vector.shape_cast %118 : vector<96xf32> to vector<96x1xf32>
    %c2 = arith.constant 2 : index
    %c0_54 = arith.constant 0 : index
    %c0_55 = arith.constant 0 : index
    %120 = vector.load %arg10[%c2, %c0_54, %c0_55] : memref<3x96x9xf32, #tpu.memory_space<vmem>>, vector<1x96x9xf32>
    %121 = vector.shape_cast %120 : vector<1x96x9xf32> to vector<96x9xf32>
    %122 = arith.mulf %109, %121 : vector<96x9xf32>
    %cst_56 = arith.constant dense<0.000000e+00> : vector<96xf32>
    %123 = vector.multi_reduction <add>, %122, %cst_56 [1] : vector<96x9xf32> to vector<96xf32>
    %124 = vector.shape_cast %123 : vector<96xf32> to vector<96x1xf32>
    %125 = tpu.concatenate %114, %119, %124 in 1 : vector<96x1xf32>, vector<96x1xf32>, vector<96x1xf32> -> vector<96x3xf32>
    %c0_57 = arith.constant 0 : index
    %c0_58 = arith.constant 0 : index
    %126 = vector.load %arg11[%c0_57, %c0_58] : memref<8x96xf32, #tpu.memory_space<vmem>>, vector<8x96xf32>
    %cst_59 = arith.constant dense<0.000000e+00> : vector<8x3xf32>
    %127 = tpu.matmul %126, %125, %cst_59 {dimension_numbers = #tpu.dot_dimension_numbers<[1], [0], [0], [1], [0, 0, 1, 1], [], []>} : vector<8x96xf32>, vector<96x3xf32>, vector<8x3xf32> -> vector<8x3xf32>
    %c0_60 = arith.constant 0 : index
    %c0_61 = arith.constant 0 : index
    %128 = vector.load %arg12[%c0_60, %c0_61] : memref<1x3xf32, #tpu.memory_space<vmem>>, vector<1x3xf32>
    %129 = vector.broadcast %128 : vector<1x3xf32> to vector<8x3xf32>
    %130 = arith.addf %127, %129 : vector<8x3xf32>
    %cst_62 = arith.constant 0.000000e+00 : f32
    %131 = vector.broadcast %cst_62 : f32 to vector<8x125xf32>
    %132 = tpu.concatenate %130, %131 in 1 : vector<8x3xf32>, vector<8x125xf32> -> vector<8x128xf32>
    %c0_63 = arith.constant 0 : index
    %c0_64 = arith.constant 0 : index
    %c0_65 = arith.constant 0 : index
    %133 = vector.load %arg13[%c0_63, %c0_64, %c0_65] : memref<1x8x128xf32, #tpu.memory_space<vmem>>, vector<1x8x128xf32>
    %134 = vector.shape_cast %133 : vector<1x8x128xf32> to vector<8x128xf32>
    %135 = vector.shape_cast %132 : vector<8x128xf32> to vector<1x8x128xf32>
    tpu.vector_store %arg13[%c0_63, %c0_64, %c0_65], %135 {strides = array<i32>} : memref<1x8x128xf32, #tpu.memory_space<vmem>>, vector<1x8x128xf32>,
    return
  }
  func.func @transform_0(%arg0: i32) -> (i32, i32, i32) {
    %c0_i32 = arith.constant 0 : i32
    %c0_i32_0 = arith.constant 0 : i32
    %c0_i32_1 = arith.constant 0 : i32
    return %arg0, %c0_i32, %c0_i32_0 : i32, i32, i32
  }
  func.func @transform_1(%arg0: i32) -> (i32, i32) {
    %c0_i32 = arith.constant 0 : i32
    %c0_i32_0 = arith.constant 0 : i32
    %c0_i32_1 = arith.constant 0 : i32
    return %c0_i32, %c0_i32_0 : i32, i32
  }
  func.func @transform_2(%arg0: i32) -> (i32, i32) {
    %c0_i32 = arith.constant 0 : i32
    %c0_i32_0 = arith.constant 0 : i32
    %c0_i32_1 = arith.constant 0 : i32
    return %c0_i32, %c0_i32_0 : i32, i32
  }
  func.func @transform_3(%arg0: i32) -> (i32, i32) {
    %c0_i32 = arith.constant 0 : i32
    %c0_i32_0 = arith.constant 0 : i32
    %c0_i32_1 = arith.constant 0 : i32
    return %c0_i32, %c0_i32_0 : i32, i32
  }
  func.func @transform_4(%arg0: i32) -> (i32, i32) {
    %c0_i32 = arith.constant 0 : i32
    %c0_i32_0 = arith.constant 0 : i32
    %c0_i32_1 = arith.constant 0 : i32
    return %c0_i32, %c0_i32_0 : i32, i32
  }
  func.func @transform_5(%arg0: i32) -> (i32, i32) {
    %c0_i32 = arith.constant 0 : i32
    %c0_i32_0 = arith.constant 0 : i32
    %c0_i32_1 = arith.constant 0 : i32
    return %c0_i32, %c0_i32_0 : i32, i32
  }
  func.func @transform_6(%arg0: i32) -> (i32, i32) {
    %c0_i32 = arith.constant 0 : i32
    %c0_i32_0 = arith.constant 0 : i32
    %c0_i32_1 = arith.constant 0 : i32
    return %c0_i32, %c0_i32_0 : i32, i32
  }
  func.func @transform_7(%arg0: i32) -> (i32, i32) {
    %c0_i32 = arith.constant 0 : i32
    %c0_i32_0 = arith.constant 0 : i32
    %c0_i32_1 = arith.constant 0 : i32
    return %c0_i32, %c0_i32_0 : i32, i32
  }
  func.func @transform_8(%arg0: i32) -> (i32, i32) {
    %c0_i32 = arith.constant 0 : i32
    %c0_i32_0 = arith.constant 0 : i32
    %c0_i32_1 = arith.constant 0 : i32
    return %c0_i32, %c0_i32_0 : i32, i32
  }
  func.func @transform_9(%arg0: i32) -> (i32, i32, i32) {
    %c0_i32 = arith.constant 0 : i32
    %c0_i32_0 = arith.constant 0 : i32
    %c0_i32_1 = arith.constant 0 : i32
    %c0_i32_2 = arith.constant 0 : i32
    return %c0_i32, %c0_i32_0, %c0_i32_1 : i32, i32, i32
  }
  func.func @transform_10(%arg0: i32) -> (i32, i32) {
    %c0_i32 = arith.constant 0 : i32
    %c0_i32_0 = arith.constant 0 : i32
    %c0_i32_1 = arith.constant 0 : i32
    return %c0_i32, %c0_i32_0 : i32, i32
  }
  func.func @transform_11(%arg0: i32) -> (i32, i32) {
    %c0_i32 = arith.constant 0 : i32
    %c0_i32_0 = arith.constant 0 : i32
    %c0_i32_1 = arith.constant 0 : i32
    return %c0_i32, %c0_i32_0 : i32, i32
  }
  func.func @transform_12(%arg0: i32) -> (i32, i32, i32) {
    %c0_i32 = arith.constant 0 : i32
    %c0_i32_0 = arith.constant 0 : i32
    %c0_i32_1 = arith.constant 0 : i32
    return %arg0, %c0_i32, %c0_i32_0 : i32, i32, i32
  }
}

</mosaic_0001>

<llo_original>
// kernel: tpu_custom_call.1
$region0: #{tpu_custom_call.1}
  #allocation0 [shape = 'u32[]', space=smem, size = 0x4, offset = 0x4, fixed_abs, tag = 'smem constant byte address 0x4 - core index']
  #allocation1 [shape = 'u32[144,128]{1,0:T(1,128)}', space=vmem, size = 0x12000, scoped, tag = 'internal scratch']
  #allocation2 [shape = 'f32[128,128]{1,0:T(8,128)}', space=vmem, size = 0x10000, scoped, tag = 'scratch operand']
  %s0 = inlined_call_operand.vmem [shape: f32[1,16,143], index: 0, kind: input, shape index: {}]
  %s1 = inlined_call_operand.hbm [shape: f32[143,1024], index: 1, kind: input, shape index: {}]
  %s2 = inlined_call_operand.vmem [shape: f32[96,128], index: 2, kind: input, shape index: {}]
  %s3 = inlined_call_operand.vmem [shape: f32[96,1], index: 3, kind: input, shape index: {}]
  %s4 = inlined_call_operand.vmem [shape: f32[128,16], index: 4, kind: input, shape index: {}]
  %s5 = inlined_call_operand.vmem [shape: f32[96,8], index: 5, kind: input, shape index: {}]
  %s6 = inlined_call_operand.vmem [shape: f32[96,1], index: 6, kind: input, shape index: {}]
  %s7 = inlined_call_operand.vmem [shape: f32[96,96], index: 7, kind: input, shape index: {}]
  %s8 = inlined_call_operand.vmem [shape: f32[96,1], index: 8, kind: input, shape index: {}]
  %s9 = inlined_call_operand.vmem [shape: f32[3,96,9], index: 9, kind: input, shape index: {}]
  %s10 = inlined_call_operand.vmem [shape: f32[8,96], index: 10, kind: input, shape index: {}]
  %s11 = inlined_call_operand.vmem [shape: f32[1,3], index: 11, kind: input, shape index: {}]
  %s12 = inlined_call_operand.hbm [shape: f32[1,8,128], index: 12, kind: output, shape index: {}]
  %s13 = sld [smem:[#allocation0]]
  $region62: #{tpu_custom_call.1} parent=0
    _
  %s15 = ssub.s32 1, %s13
  %s16 = scalar_select 0, %s15, %s13
  $region1: #{tpu_custom_call.1} parent=0
    #allocation3 [shape = 'u8[589824]{0}', space=vmem, size = 0x90000, scoped, tag = 'input window, operand 1, single buffered']
    #allocation4 [shape = 's32[1]{0}', space=sflag, size = 0x4, scoped, tag = 'scoped memory for tpu_custom_call.1']
    #allocation5 [shape = 's32[1]{0}', space=sflag, size = 0x4, scoped, tag = 'scoped memory for tpu_custom_call.1']
    #allocation6 [shape = 'u8[4096]{0}', space=vmem, size = 0x1000, scoped, tag = 'output window, operand 0, single buffered']
    %17 = vsyncpa [#allocation4], 0
    %18 = vsyncpa [#allocation5], 0
    // Predicated region
    $region2: #{tpu_custom_call.1} parent=1 // pred_check
      _
    $region3: #{tpu_custom_call.1} parent=1 // pred_check_branch
      %20 = sbr.rel (0) target = $region5
    $region4: #{tpu_custom_call.1} parent=1 // pred_region
      _
    $region5: #{tpu_custom_call.1} parent=1 // pred_fallthru
      _
    // Predicated region
    $region6: #{tpu_custom_call.1} parent=1 // pred_check
      _
    $region7: #{tpu_custom_call.1} parent=1 // pred_check_branch
      %22 = sbr.rel (0) target = $region9
    $region8: #{tpu_custom_call.1} parent=1 // pred_region
      %s24 = ssub.s32 18432, 18432
      %25 = vsyncadd [#allocation4], %s24
      %s26 = sshll.u32 [#allocation3], 4
      %s27 = int_to_ptr.vmem [resolvable:$true] %s26
      %32 = dma.hbm_to_vmem [thread:$0]  %s1, 18432, %s27, [#allocation4], 1024, 1024, 64
    $region9: #{tpu_custom_call.1} parent=1 // pred_fallthru
      _
    // Predicated region
    $region10: #{tpu_custom_call.1} parent=1 // pred_check
      _
    $region11: #{tpu_custom_call.1} parent=1 // pred_check_branch
      %34 = sbr.rel (0) target = $region13
    $region12: #{tpu_custom_call.1} parent=1 // pred_region
      _
    $region13: #{tpu_custom_call.1} parent=1 // pred_fallthru
      _
    // Predicated region
    $region14: #{tpu_custom_call.1} parent=1 // pred_check
      _
    $region15: #{tpu_custom_call.1} parent=1 // pred_check_branch
      %36 = sbr.rel (0) target = $region17
    $region16: #{tpu_custom_call.1} parent=1 // pred_region
      _
    $region17: #{tpu_custom_call.1} parent=1 // pred_fallthru
      _
    // Predicated region
    $region18: #{tpu_custom_call.1} parent=1 // pred_check
      _
    $region19: #{tpu_custom_call.1} parent=1 // pred_check_branch
      %38 = sbr.rel (0) target = $region21
    $region20: #{tpu_custom_call.1} parent=1 // pred_region
      _
    $region21: #{tpu_custom_call.1} parent=1 // pred_fallthru
      _
    // Predicated region
    $region22: #{tpu_custom_call.1} parent=1 // pred_check
      _
    $region23: #{tpu_custom_call.1} parent=1 // pred_check_branch
      %40 = sbr.rel (0) target = $region25
    $region24: #{tpu_custom_call.1} parent=1 // pred_region
      _
    $region25: #{tpu_custom_call.1} parent=1 // pred_fallthru
      _
    // Predicated region
    $region26: #{tpu_custom_call.1} parent=1 // pred_check
      _
    $region27: #{tpu_custom_call.1} parent=1 // pred_check_branch
      %42 = sbr.rel (0) target = $region29
    $region28: #{tpu_custom_call.1} parent=1 // pred_region
      _
    $region29: #{tpu_custom_call.1} parent=1 // pred_fallthru
      _
    // Predicated region
    $region30: #{tpu_custom_call.1} parent=1 // pred_check
      _
    $region31: #{tpu_custom_call.1} parent=1 // pred_check_branch
      %44 = sbr.rel (0) target = $region33
    $region32: #{tpu_custom_call.1} parent=1 // pred_region
      _
    $region33: #{tpu_custom_call.1} parent=1 // pred_fallthru
      _
    // Predicated region
    $region34: #{tpu_custom_call.1} parent=1 // pred_check
      _
    $region35: #{tpu_custom_call.1} parent=1 // pred_check_branch
      %46 = sbr.rel (0) target = $region37
    $region36: #{tpu_custom_call.1} parent=1 // pred_region
      _
    $region37: #{tpu_custom_call.1} parent=1 // pred_fallthru
      _
    // Predicated region
    $region38: #{tpu_custom_call.1} parent=1 // pred_check
      _
    $region39: #{tpu_custom_call.1} parent=1 // pred_check_branch
      %48 = sbr.rel (0) target = $region41
    $region40: #{tpu_custom_call.1} parent=1 // pred_region
      _
    $region41: #{tpu_custom_call.1} parent=1 // pred_fallthru
      _
    // Predicated region
    $region42: #{tpu_custom_call.1} parent=1 // pred_check
      _
    $region43: #{tpu_custom_call.1} parent=1 // pred_check_branch
      %50 = sbr.rel (0) target = $region45
    $region44: #{tpu_custom_call.1} parent=1 // pred_region
      _
    $region45: #{tpu_custom_call.1} parent=1 // pred_fallthru
      _
    // Predicated region
    $region46: #{tpu_custom_call.1} parent=1 // pred_check
      _
    $region47: #{tpu_custom_call.1} parent=1 // pred_check_branch
      %52 = sbr.rel (0) target = $region49
    $region48: #{tpu_custom_call.1} parent=1 // pred_region
      _
    $region49: #{tpu_custom_call.1} parent=1 // pred_fallthru
      _
    // Predicated region
    $region50: #{tpu_custom_call.1} parent=1 // pred_check
      _
    $region51: #{tpu_custom_call.1} parent=1 // pred_check_branch
      %54 = sbr.rel (0) target = $region53
    $region52: #{tpu_custom_call.1} parent=1 // pred_region
      %55 = dma.done [#allocation4], 18432
    $region53: #{tpu_custom_call.1} parent=1 // pred_fallthru
      _
    %v56 = vld [vmem:[%s0] sm:$0xff]
    %v57 = vld [vmem:[%s0 + $0x8] sm:$0xff]
    %v58 = vld [vmem:[%s0 + $0x10] sm:$0xff]
    %v59 = vld [vmem:[%s0 + $0x18] sm:$0xff]
    %v60 = vld [vmem:[#allocation3] sm:$0xff]
    %v61 = vld [vmem:[#allocation3 + $0x8] sm:$0xff]
    %v62 = vld [vmem:[#allocation3 + $0x10] sm:$0xff]
    %v63 = vld [vmem:[#allocation3 + $0x18] sm:$0xff]
    %v64 = vld [vmem:[#allocation3 + $0x20] sm:$0xff]
    %v65 = vld [vmem:[#allocation3 + $0x28] sm:$0xff]
    %v66 = vld [vmem:[#allocation3 + $0x30] sm:$0xff]
    %v67 = vld [vmem:[#allocation3 + $0x38] sm:$0xff]
    %v68 = vld [vmem:[#allocation3 + $0x40] sm:$0xff]
    %v69 = vld [vmem:[#allocation3 + $0x48] sm:$0xff]
    %v70 = vld [vmem:[#allocation3 + $0x50] sm:$0xff]
    %v71 = vld [vmem:[#allocation3 + $0x58] sm:$0xff]
    %v72 = vld [vmem:[#allocation3 + $0x60] sm:$0xff]
    %v73 = vld [vmem:[#allocation3 + $0x68] sm:$0xff]
    %v74 = vld [vmem:[#allocation3 + $0x70] sm:$0xff]
    %v75 = vld [vmem:[#allocation3 + $0x78] sm:$0xff]
    %v76 = vld [vmem:[#allocation3 + $0x80] sm:$0xff]
    %v77 = vld [vmem:[#allocation3 + $0x88] sm:$0xff]
    %v78 = vld [vmem:[#allocation3 + $0x90] sm:$0xff]
    %v79 = vld [vmem:[#allocation3 + $0x98] sm:$0xff]
    %v80 = vld [vmem:[#allocation3 + $0xa0] sm:$0xff]
    %v81 = vld [vmem:[#allocation3 + $0xa8] sm:$0xff]
    %v82 = vld [vmem:[#allocation3 + $0xb0] sm:$0xff]
    %v83 = vld [vmem:[#allocation3 + $0xb8] sm:$0xff]
    %v84 = vld [vmem:[#allocation3 + $0xc0] sm:$0xff]
    %v85 = vld [vmem:[#allocation3 + $0xc8] sm:$0xff]
    %v86 = vld [vmem:[#allocation3 + $0xd0] sm:$0xff]
    %v87 = vld [vmem:[#allocation3 + $0xd8] sm:$0xff]
    %v88 = vld [vmem:[#allocation3 + $0xe0] sm:$0xff]
    %v89 = vld [vmem:[#allocation3 + $0xe8] sm:$0xff]
    %v90 = vld [vmem:[#allocation3 + $0xf0] sm:$0xff]
    %v91 = vld [vmem:[#allocation3 + $0xf8] sm:$0xff]
    %v92 = vld [vmem:[#allocation3 + $0x100] sm:$0xff]
    %v93 = vld [vmem:[#allocation3 + $0x108] sm:$0xff]
    %v94 = vld [vmem:[#allocation3 + $0x110] sm:$0xff]
    %v95 = vld [vmem:[#allocation3 + $0x118] sm:$0xff]
    %v96 = vld [vmem:[#allocation3 + $0x120] sm:$0xff]
    %v97 = vld [vmem:[#allocation3 + $0x128] sm:$0xff]
    %v98 = vld [vmem:[#allocation3 + $0x130] sm:$0xff]
    %v99 = vld [vmem:[#allocation3 + $0x138] sm:$0xff]
    %v100 = vld [vmem:[#allocation3 + $0x140] sm:$0xff]
    %v101 = vld [vmem:[#allocation3 + $0x148] sm:$0xff]
    %v102 = vld [vmem:[#allocation3 + $0x150] sm:$0xff]
    %v103 = vld [vmem:[#allocation3 + $0x158] sm:$0xff]
    %v104 = vld [vmem:[#allocation3 + $0x160] sm:$0xff]
    %v105 = vld [vmem:[#allocation3 + $0x168] sm:$0xff]
    %v106 = vld [vmem:[#allocation3 + $0x170] sm:$0xff]
    %v107 = vld [vmem:[#allocation3 + $0x178] sm:$0xff]
    %v108 = vld [vmem:[#allocation3 + $0x180] sm:$0xff]
    %v109 = vld [vmem:[#allocation3 + $0x188] sm:$0xff]
    %v110 = vld [vmem:[#allocation3 + $0x190] sm:$0xff]
    %v111 = vld [vmem:[#allocation3 + $0x198] sm:$0xff]
    %v112 = vld [vmem:[#allocation3 + $0x1a0] sm:$0xff]
    %v113 = vld [vmem:[#allocation3 + $0x1a8] sm:$0xff]
    %v114 = vld [vmem:[#allocation3 + $0x1b0] sm:$0xff]
    %v115 = vld [vmem:[#allocation3 + $0x1b8] sm:$0xff]
    %v116 = vld [vmem:[#allocation3 + $0x1c0] sm:$0xff]
    %v117 = vld [vmem:[#allocation3 + $0x1c8] sm:$0xff]
    %v118 = vld [vmem:[#allocation3 + $0x1d0] sm:$0xff]
    %v119 = vld [vmem:[#allocation3 + $0x1d8] sm:$0xff]
    %v120 = vld [vmem:[#allocation3 + $0x1e0] sm:$0xff]
    %v121 = vld [vmem:[#allocation3 + $0x1e8] sm:$0xff]
    %v122 = vld [vmem:[#allocation3 + $0x1f0] sm:$0xff]
    %v123 = vld [vmem:[#allocation3 + $0x1f8] sm:$0xff]
    %v124 = vld [vmem:[#allocation3 + $0x200] sm:$0xff]
    %v125 = vld [vmem:[#allocation3 + $0x208] sm:$0xff]
    %v126 = vld [vmem:[#allocation3 + $0x210] sm:$0xff]
    %v127 = vld [vmem:[#allocation3 + $0x218] sm:$0xff]
    %v128 = vld [vmem:[#allocation3 + $0x220] sm:$0xff]
    %v129 = vld [vmem:[#allocation3 + $0x228] sm:$0xff]
    %v130 = vld [vmem:[#allocation3 + $0x230] sm:$0xff]
    %v131 = vld [vmem:[#allocation3 + $0x238] sm:$0xff]
    %v132 = vld [vmem:[#allocation3 + $0x240] sm:$0xff]
    %v133 = vld [vmem:[#allocation3 + $0x248] sm:$0xff]
    %v134 = vld [vmem:[#allocation3 + $0x250] sm:$0xff]
    %v135 = vld [vmem:[#allocation3 + $0x258] sm:$0xff]
    %v136 = vld [vmem:[#allocation3 + $0x260] sm:$0xff]
    %v137 = vld [vmem:[#allocation3 + $0x268] sm:$0xff]
    %v138 = vld [vmem:[#allocation3 + $0x270] sm:$0xff]
    %v139 = vld [vmem:[#allocation3 + $0x278] sm:$0xff]
    %v140 = vld [vmem:[#allocation3 + $0x280] sm:$0xff]
    %v141 = vld [vmem:[#allocation3 + $0x288] sm:$0xff]
    %v142 = vld [vmem:[#allocation3 + $0x290] sm:$0xff]
    %v143 = vld [vmem:[#allocation3 + $0x298] sm:$0xff]
    %v144 = vld [vmem:[#allocation3 + $0x2a0] sm:$0xff]
    %v145 = vld [vmem:[#allocation3 + $0x2a8] sm:$0xff]
    %v146 = vld [vmem:[#allocation3 + $0x2b0] sm:$0xff]
    %v147 = vld [vmem:[#allocation3 + $0x2b8] sm:$0xff]
    %v148 = vld [vmem:[#allocation3 + $0x2c0] sm:$0xff]
    %v149 = vld [vmem:[#allocation3 + $0x2c8] sm:$0xff]
    %v150 = vld [vmem:[#allocation3 + $0x2d0] sm:$0xff]
    %v151 = vld [vmem:[#allocation3 + $0x2d8] sm:$0xff]
    %v152 = vld [vmem:[#allocation3 + $0x2e0] sm:$0xff]
    %v153 = vld [vmem:[#allocation3 + $0x2e8] sm:$0xff]
    %v154 = vld [vmem:[#allocation3 + $0x2f0] sm:$0xff]
    %v155 = vld [vmem:[#allocation3 + $0x2f8] sm:$0xff]
    %v156 = vld [vmem:[#allocation3 + $0x300] sm:$0xff]
    %v157 = vld [vmem:[#allocation3 + $0x308] sm:$0xff]
    %v158 = vld [vmem:[#allocation3 + $0x310] sm:$0xff]
    %v159 = vld [vmem:[#allocation3 + $0x318] sm:$0xff]
    %v160 = vld [vmem:[#allocation3 + $0x320] sm:$0xff]
    %v161 = vld [vmem:[#allocation3 + $0x328] sm:$0xff]
    %v162 = vld [vmem:[#allocation3 + $0x330] sm:$0xff]
    %v163 = vld [vmem:[#allocation3 + $0x338] sm:$0xff]
    %v164 = vld [vmem:[#allocation3 + $0x340] sm:$0xff]
    %v165 = vld [vmem:[#allocation3 + $0x348] sm:$0xff]
    %v166 = vld [vmem:[#allocation3 + $0x350] sm:$0xff]
    %v167 = vld [vmem:[#allocation3 + $0x358] sm:$0xff]
    %v168 = vld [vmem:[#allocation3 + $0x360] sm:$0xff]
    %v169 = vld [vmem:[#allocation3 + $0x368] sm:$0xff]
    %v170 = vld [vmem:[#allocation3 + $0x370] sm:$0xff]
    %v171 = vld [vmem:[#allocation3 + $0x378] sm:$0xff]
    %v172 = vld [vmem:[#allocation3 + $0x380] sm:$0xff]
    %v173 = vld [vmem:[#allocation3 + $0x388] sm:$0xff]
    %v174 = vld [vmem:[#allocation3 + $0x390] sm:$0xff]
    %v175 = vld [vmem:[#allocation3 + $0x398] sm:$0xff]
    %v176 = vld [vmem:[#allocation3 + $0x3a0] sm:$0xff]
    %v177 = vld [vmem:[#allocation3 + $0x3a8] sm:$0xff]
    %v178 = vld [vmem:[#allocation3 + $0x3b0] sm:$0xff]
    %v179 = vld [vmem:[#allocation3 + $0x3b8] sm:$0xff]
    %v180 = vld [vmem:[#allocation3 + $0x3c0] sm:$0xff]
    %v181 = vld [vmem:[#allocation3 + $0x3c8] sm:$0xff]
    %v182 = vld [vmem:[#allocation3 + $0x3d0] sm:$0xff]
    %v183 = vld [vmem:[#allocation3 + $0x3d8] sm:$0xff]
    %v184 = vld [vmem:[#allocation3 + $0x3e0] sm:$0xff]
    %v185 = vld [vmem:[#allocation3 + $0x3e8] sm:$0xff]
    %v186 = vld [vmem:[#allocation3 + $0x3f0] sm:$0xff]
    %v187 = vld [vmem:[#allocation3 + $0x3f8] sm:$0xff]
    %v188 = vld [vmem:[#allocation3 + $0x400] sm:$0xff]
    %v189 = vld [vmem:[#allocation3 + $0x408] sm:$0xff]
    %v190 = vld [vmem:[#allocation3 + $0x410] sm:$0xff]
    %v191 = vld [vmem:[#allocation3 + $0x418] sm:$0xff]
    %v192 = vld [vmem:[#allocation3 + $0x420] sm:$0xff]
    %v193 = vld [vmem:[#allocation3 + $0x428] sm:$0xff]
    %v194 = vld [vmem:[#allocation3 + $0x430] sm:$0xff]
    %v195 = vld [vmem:[#allocation3 + $0x438] sm:$0xff]
    %v196 = vld [vmem:[#allocation3 + $0x440] sm:$0x7f]
    %v197 = vld [vmem:[#allocation3 + $0x448] sm:$0x7f]
    %v198 = vld [vmem:[#allocation3 + $0x450] sm:$0x7f]
    %v199 = vld [vmem:[#allocation3 + $0x458] sm:$0x7f]
    %v200 = vld [vmem:[#allocation3 + $0x460] sm:$0x7f]
    %v201 = vld [vmem:[#allocation3 + $0x468] sm:$0x7f]
    %v202 = vld [vmem:[#allocation3 + $0x470] sm:$0x7f]
    %v203 = vld [vmem:[#allocation3 + $0x478] sm:$0x7f]
    %vm204 = vcmask 121856
    %v206 = vsel %vm204, %v57, 0
    %v209 = vsel %vm204, %v59, 0
    %vm211 = vcmask 1046528
    %v213 = vsel %vm211, %v196, 0
    %v216 = vsel %vm211, %v197, 0
    %v219 = vsel %vm211, %v198, 0
    %v222 = vsel %vm211, %v199, 0
    %v225 = vsel %vm211, %v200, 0
    %v228 = vsel %vm211, %v201, 0
    %v231 = vsel %vm211, %v202, 0
    %v234 = vsel %vm211, %v203, 0
    %236 = vmatprep.subr.mxu0 %v61
    %237 = vmatpush1.msra.mxu0 %v60
    %238 = vmatprep.subr.mxu0 %v69
    %239 = vmatpush1.msra.mxu0 %v68
    %240 = vmatprep.subr.mxu0 %v77
    %241 = vmatpush1.msra.mxu0 %v76
    %242 = vmatprep.subr.mxu0 %v85
    %243 = vmatpush1.msra.mxu0 %v84
    %244 = vmatprep.subr.mxu0 %v93
    %245 = vmatpush1.msra.mxu0 %v92
    %246 = vmatprep.subr.mxu0 %v101
    %247 = vmatpush1.msra.mxu0 %v100
    %248 = vmatprep.subr.mxu0 %v109
    %249 = vmatpush1.msra.mxu0 %v108
    %250 = vmatprep.subr.mxu0 %v117
    %251 = vmatpush1.msra.mxu0 %v116
    %252 = vmatprep.subr.mxu0 %v125
    %253 = vmatpush1.msra.mxu0 %v124
    %254 = vmatprep.subr.mxu0 %v133
    %255 = vmatpush1.msra.mxu0 %v132
    %256 = vmatprep.subr.mxu0 %v141
    %257 = vmatpush1.msra.mxu0 %v140
    %258 = vmatprep.subr.mxu0 %v149
    %259 = vmatpush1.msra.mxu0 %v148
    %260 = vmatprep.subr.mxu0 %v157
    %261 = vmatpush1.msra.mxu0 %v156
    %262 = vmatprep.subr.mxu0 %v165
    %263 = vmatpush1.msra.mxu0 %v164
    %264 = vmatprep.subr.mxu0 %v173
    %265 = vmatpush1.msra.mxu0 %v172
    %266 = vmatprep.subr.mxu0 %v181
    %267 = vmatpush1.msra.mxu0 %v180
    %268 = vmatprep.subr.mxu0 %v189
    %269 = vmatpush1.msra.mxu0 %v188
    %270 = vmatprep.subr.mxu0 %v216
    %271 = vmatpush1.msra.mxu0 %v213
    %272 = vmatprep.subr.mxu0 0.0
    %273 = vmatpush1.msra.mxu0 0.0
    %274 = vmatprep.subr.mxu0 0.0
    %275 = vmatpush1.msra.mxu0 0.0
    %276 = vmatprep.subr.mxu0 0.0
    %277 = vmatpush1.msra.mxu0 0.0
    %278 = vmatprep.subr.mxu0 0.0
    %279 = vmatpush1.msra.mxu0 0.0
    %280 = vmatprep.subr.mxu0 0.0
    %281 = vmatpush1.msra.mxu0 0.0
    %282 = vmatprep.subr.mxu0 0.0
    %283 = vmatpush1.msra.mxu0 0.0
    %284 = vmatprep.subr.mxu0 0.0
    %285 = vmatpush1.msra.mxu0 0.0
    %286 = vmatprep.subr.mxu0 0.0
    %287 = vmatpush1.msra.mxu0 0.0
    %288 = vmatprep.subr.mxu0 0.0
    %289 = vmatpush1.msra.mxu0 0.0
    %290 = vmatprep.subr.mxu0 0.0
    %291 = vmatpush1.msra.mxu0 0.0
    %292 = vmatprep.subr.mxu0 0.0
    %293 = vmatpush1.msra.mxu0 0.0
    %294 = vmatprep.subr.mxu0 0.0
    %295 = vmatpush1.msra.mxu0 0.0
    %296 = vmatprep.subr.mxu0 0.0
    %297 = vmatpush1.msra.mxu0 0.0
    %298 = vmatprep.subr.mxu0 0.0
    %299 = vmatpush1.msra.mxu0 0.0
    %300 = vmatprep.mubr.f32.mxu0 %v206
    %301 = vmatmul.mubr.f32.gmra.mrb[0].mxu0 %v56
    %v302 = vpop.f32.mrb[0].mxu0
    %v303 = vadd.f32 0.0, %v302
    %v304 = vpop.f32.mrb[0].mxu0
    %v305 = vadd.f32 0.0, %v304
    %306 = vmatprep.mubr.f32.mxu0 %v209
    %307 = vmatmul.mubr.f32.gmra.mrb[0].mxu0 %v58
    %v308 = vpop.f32.mrb[0].mxu0
    %v309 = vadd.f32 0.0, %v308
    %v310 = vpop.f32.mrb[0].mxu0
    %v311 = vadd.f32 0.0, %v310
    %312 = vdwg.mxu0
    %313 = vmatprep.subr.mxu0 %v63
    %314 = vmatpush1.msra.mxu0 %v62
    %315 = vmatprep.subr.mxu0 %v71
    %316 = vmatpush1.msra.mxu0 %v70
    %317 = vmatprep.subr.mxu0 %v79
    %318 = vmatpush1.msra.mxu0 %v78
    %319 = vmatprep.subr.mxu0 %v87
    %320 = vmatpush1.msra.mxu0 %v86
    %321 = vmatprep.subr.mxu0 %v95
    %322 = vmatpush1.msra.mxu0 %v94
    %323 = vmatprep.subr.mxu0 %v103
    %324 = vmatpush1.msra.mxu0 %v102
    %325 = vmatprep.subr.mxu0 %v111
    %326 = vmatpush1.msra.mxu0 %v110
    %327 = vmatprep.subr.mxu0 %v119
    %328 = vmatpush1.msra.mxu0 %v118
    %329 = vmatprep.subr.mxu0 %v127
    %330 = vmatpush1.msra.mxu0 %v126
    %331 = vmatprep.subr.mxu0 %v135
    %332 = vmatpush1.msra.mxu0 %v134
    %333 = vmatprep.subr.mxu0 %v143
    %334 = vmatpush1.msra.mxu0 %v142
    %335 = vmatprep.subr.mxu0 %v151
    %336 = vmatpush1.msra.mxu0 %v150
    %337 = vmatprep.subr.mxu0 %v159
    %338 = vmatpush1.msra.mxu0 %v158
    %339 = vmatprep.subr.mxu0 %v167
    %340 = vmatpush1.msra.mxu0 %v166
    %341 = vmatprep.subr.mxu0 %v175
    %342 = vmatpush1.msra.mxu0 %v174
    %343 = vmatprep.subr.mxu0 %v183
    %344 = vmatpush1.msra.mxu0 %v182
    %345 = vmatprep.subr.mxu0 %v191
    %346 = vmatpush1.msra.mxu0 %v190
    %347 = vmatprep.subr.mxu0 %v222
    %348 = vmatpush1.msra.mxu0 %v219
    %349 = vmatprep.subr.mxu0 0.0
    %350 = vmatpush1.msra.mxu0 0.0
    %351 = vmatprep.subr.mxu0 0.0
    %352 = vmatpush1.msra.mxu0 0.0
    %353 = vmatprep.subr.mxu0 0.0
    %354 = vmatpush1.msra.mxu0 0.0
    %355 = vmatprep.subr.mxu0 0.0
    %356 = vmatpush1.msra.mxu0 0.0
    %357 = vmatprep.subr.mxu0 0.0
    %358 = vmatpush1.msra.mxu0 0.0
    %359 = vmatprep.subr.mxu0 0.0
    %360 = vmatpush1.msra.mxu0 0.0
    %361 = vmatprep.subr.mxu0 0.0
    %362 = vmatpush1.msra.mxu0 0.0
    %363 = vmatprep.subr.mxu0 0.0
    %364 = vmatpush1.msra.mxu0 0.0
    %365 = vmatprep.subr.mxu0 0.0
    %366 = vmatpush1.msra.mxu0 0.0
    %367 = vmatprep.subr.mxu0 0.0
    %368 = vmatpush1.msra.mxu0 0.0
    %369 = vmatprep.subr.mxu0 0.0
    %370 = vmatpush1.msra.mxu0 0.0
    %371 = vmatprep.subr.mxu0 0.0
    %372 = vmatpush1.msra.mxu0 0.0
    %373 = vmatprep.subr.mxu0 0.0
    %374 = vmatpush1.msra.mxu0 0.0
    %375 = vmatprep.subr.mxu0 0.0
    %376 = vmatpush1.msra.mxu0 0.0
    %377 = vmatprep.mubr.f32.mxu0 %v206
    %378 = vmatmul.mubr.f32.gmra.mrb[0].mxu0 %v56
    %v379 = vpop.f32.mrb[0].mxu0
    %v380 = vadd.f32 0.0, %v379
    %v381 = vpop.f32.mrb[0].mxu0
    %v382 = vadd.f32 0.0, %v381
    %383 = vmatprep.mubr.f32.mxu0 %v209
    %384 = vmatmul.mubr.f32.gmra.mrb[0].mxu0 %v58
    %v385 = vpop.f32.mrb[0].mxu0
    %v386 = vadd.f32 0.0, %v385
    %v387 = vpop.f32.mrb[0].mxu0
    %v388 = vadd.f32 0.0, %v387
    %389 = vdwg.mxu0
    %390 = vmatprep.subr.mxu0 %v65
    %391 = vmatpush1.msra.mxu0 %v64
    %392 = vmatprep.subr.mxu0 %v73
    %393 = vmatpush1.msra.mxu0 %v72
    %394 = vmatprep.subr.mxu0 %v81
    %395 = vmatpush1.msra.mxu0 %v80
    %396 = vmatprep.subr.mxu0 %v89
    %397 = vmatpush1.msra.mxu0 %v88
    %398 = vmatprep.subr.mxu0 %v97
    %399 = vmatpush1.msra.mxu0 %v96
    %400 = vmatprep.subr.mxu0 %v105
    %401 = vmatpush1.msra.mxu0 %v104
    %402 = vmatprep.subr.mxu0 %v113
    %403 = vmatpush1.msra.mxu0 %v112
    %404 = vmatprep.subr.mxu0 %v121
    %405 = vmatpush1.msra.mxu0 %v120
    %406 = vmatprep.subr.mxu0 %v129
    %407 = vmatpush1.msra.mxu0 %v128
    %408 = vmatprep.subr.mxu0 %v137
    %409 = vmatpush1.msra.mxu0 %v136
    %410 = vmatprep.subr.mxu0 %v145
    %411 = vmatpush1.msra.mxu0 %v144
    %412 = vmatprep.subr.mxu0 %v153
    %413 = vmatpush1.msra.mxu0 %v152
    %414 = vmatprep.subr.mxu0 %v161
    %415 = vmatpush1.msra.mxu0 %v160
    %416 = vmatprep.subr.mxu0 %v169
    %417 = vmatpush1.msra.mxu0 %v168
    %418 = vmatprep.subr.mxu0 %v177
    %419 = vmatpush1.msra.mxu0 %v176
    %420 = vmatprep.subr.mxu0 %v185
    %421 = vmatpush1.msra.mxu0 %v184
    %422 = vmatprep.subr.mxu0 %v193
    %423 = vmatpush1.msra.mxu0 %v192
    %424 = vmatprep.subr.mxu0 %v228
    %425 = vmatpush1.msra.mxu0 %v225
    %426 = vmatprep.subr.mxu0 0.0
    %427 = vmatpush1.msra.mxu0 0.0
    %428 = vmatprep.subr.mxu0 0.0
    %429 = vmatpush1.msra.mxu0 0.0
    %430 = vmatprep.subr.mxu0 0.0
    %431 = vmatpush1.msra.mxu0 0.0
    %432 = vmatprep.subr.mxu0 0.0
    %433 = vmatpush1.msra.mxu0 0.0
    %434 = vmatprep.subr.mxu0 0.0
    %435 = vmatpush1.msra.mxu0 0.0
    %436 = vmatprep.subr.mxu0 0.0
    %437 = vmatpush1.msra.mxu0 0.0
    %438 = vmatprep.subr.mxu0 0.0
    %439 = vmatpush1.msra.mxu0 0.0
    %440 = vmatprep.subr.mxu0 0.0
    %441 = vmatpush1.msra.mxu0 0.0
    %442 = vmatprep.subr.mxu0 0.0
    %443 = vmatpush1.msra.mxu0 0.0
    %444 = vmatprep.subr.mxu0 0.0
    %445 = vmatpush1.msra.mxu0 0.0
    %446 = vmatprep.subr.mxu0 0.0
    %447 = vmatpush1.msra.mxu0 0.0
    %448 = vmatprep.subr.mxu0 0.0
    %449 = vmatpush1.msra.mxu0 0.0
    %450 = vmatprep.subr.mxu0 0.0
    %451 = vmatpush1.msra.mxu0 0.0
    %452 = vmatprep.subr.mxu0 0.0
    %453 = vmatpush1.msra.mxu0 0.0
    %454 = vmatprep.mubr.f32.mxu0 %v206
    %455 = vmatmul.mubr.f32.gmra.mrb[0].mxu0 %v56
    %v456 = vpop.f32.mrb[0].mxu0
    %v457 = vadd.f32 0.0, %v456
    %v458 = vpop.f32.mrb[0].mxu0
    %v459 = vadd.f32 0.0, %v458
    %460 = vmatprep.mubr.f32.mxu0 %v209
    %461 = vmatmul.mubr.f32.gmra.mrb[0].mxu0 %v58
    %v462 = vpop.f32.mrb[0].mxu0
    %v463 = vadd.f32 0.0, %v462
    %v464 = vpop.f32.mrb[0].mxu0
    %v465 = vadd.f32 0.0, %v464
    %466 = vdwg.mxu0
    %467 = vmatprep.subr.mxu0 %v67
    %468 = vmatpush1.msra.mxu0 %v66
    %469 = vmatprep.subr.mxu0 %v75
    %470 = vmatpush1.msra.mxu0 %v74
    %471 = vmatprep.subr.mxu0 %v83
    %472 = vmatpush1.msra.mxu0 %v82
    %473 = vmatprep.subr.mxu0 %v91
    %474 = vmatpush1.msra.mxu0 %v90
    %475 = vmatprep.subr.mxu0 %v99
    %476 = vmatpush1.msra.mxu0 %v98
    %477 = vmatprep.subr.mxu0 %v107
    %478 = vmatpush1.msra.mxu0 %v106
    %479 = vmatprep.subr.mxu0 %v115
    %480 = vmatpush1.msra.mxu0 %v114
    %481 = vmatprep.subr.mxu0 %v123
    %482 = vmatpush1.msra.mxu0 %v122
    %483 = vmatprep.subr.mxu0 %v131
    %484 = vmatpush1.msra.mxu0 %v130
    %485 = vmatprep.subr.mxu0 %v139
    %486 = vmatpush1.msra.mxu0 %v138
    %487 = vmatprep.subr.mxu0 %v147
    %488 = vmatpush1.msra.mxu0 %v146
    %489 = vmatprep.subr.mxu0 %v155
    %490 = vmatpush1.msra.mxu0 %v154
    %491 = vmatprep.subr.mxu0 %v163
    %492 = vmatpush1.msra.mxu0 %v162
    %493 = vmatprep.subr.mxu0 %v171
    %494 = vmatpush1.msra.mxu0 %v170
    %495 = vmatprep.subr.mxu0 %v179
    %496 = vmatpush1.msra.mxu0 %v178
    %497 = vmatprep.subr.mxu0 %v187
    %498 = vmatpush1.msra.mxu0 %v186
    %499 = vmatprep.subr.mxu0 %v195
    %500 = vmatpush1.msra.mxu0 %v194
    %501 = vmatprep.subr.mxu0 %v234
    %502 = vmatpush1.msra.mxu0 %v231
    %503 = vmatprep.subr.mxu0 0.0
    %504 = vmatpush1.msra.mxu0 0.0
    %505 = vmatprep.subr.mxu0 0.0
    %506 = vmatpush1.msra.mxu0 0.0
    %507 = vmatprep.subr.mxu0 0.0
    %508 = vmatpush1.msra.mxu0 0.0
    %509 = vmatprep.subr.mxu0 0.0
    %510 = vmatpush1.msra.mxu0 0.0
    %511 = vmatprep.subr.mxu0 0.0
    %512 = vmatpush1.msra.mxu0 0.0
    %513 = vmatprep.subr.mxu0 0.0
    %514 = vmatpush1.msra.mxu0 0.0
    %515 = vmatprep.subr.mxu0 0.0
    %516 = vmatpush1.msra.mxu0 0.0
    %517 = vmatprep.subr.mxu0 0.0
    %518 = vmatpush1.msra.mxu0 0.0
    %519 = vmatprep.subr.mxu0 0.0
    %520 = vmatpush1.msra.mxu0 0.0
    %521 = vmatprep.subr.mxu0 0.0
    %522 = vmatpush1.msra.mxu0 0.0
    %523 = vmatprep.subr.mxu0 0.0
    %524 = vmatpush1.msra.mxu0 0.0
    %525 = vmatprep.subr.mxu0 0.0
    %526 = vmatpush1.msra.mxu0 0.0
    %527 = vmatprep.subr.mxu0 0.0
    %528 = vmatpush1.msra.mxu0 0.0
    %529 = vmatprep.subr.mxu0 0.0
    %530 = vmatpush1.msra.mxu0 0.0
    %531 = vmatprep.mubr.f32.mxu0 %v206
    %532 = vmatmul.mubr.f32.gmra.mrb[0].mxu0 %v56
    %v533 = vpop.f32.mrb[0].mxu0
    %v534 = vadd.f32 0.0, %v533
    %v535 = vpop.f32.mrb[0].mxu0
    %v536 = vadd.f32 0.0, %v535
    %537 = vmatprep.mubr.f32.mxu0 %v209
    %538 = vmatmul.mubr.f32.gmra.mrb[0].mxu0 %v58
    %v539 = vpop.f32.mrb[0].mxu0
    %v540 = vadd.f32 0.0, %v539
    %v541 = vpop.f32.mrb[0].mxu0
    %v542 = vadd.f32 0.0, %v541
    %543 = vdwg.mxu0
    %544 = vst [vmem:[#allocation2] sm:$0xff] %v303
    %545 = vst [vmem:[#allocation2 + $0x8] sm:$0xff] %v305
    %546 = vst [vmem:[#allocation2 + $0x10] sm:$0xff] %v380
    %547 = vst [vmem:[#allocation2 + $0x18] sm:$0xff] %v382
    %548 = vst [vmem:[#allocation2 + $0x20] sm:$0xff] %v457
    %549 = vst [vmem:[#allocation2 + $0x28] sm:$0xff] %v459
    %550 = vst [vmem:[#allocation2 + $0x30] sm:$0xff] %v534
    %551 = vst [vmem:[#allocation2 + $0x38] sm:$0xff] %v536
    %552 = vst [vmem:[#allocation2 + $0x40] sm:$0xff] %v309
    %553 = vst [vmem:[#allocation2 + $0x48] sm:$0xff] %v311
    %554 = vst [vmem:[#allocation2 + $0x50] sm:$0xff] %v386
    %555 = vst [vmem:[#allocation2 + $0x58] sm:$0xff] %v388
    %556 = vst [vmem:[#allocation2 + $0x60] sm:$0xff] %v463
    %557 = vst [vmem:[#allocation2 + $0x68] sm:$0xff] %v465
    %558 = vst [vmem:[#allocation2 + $0x70] sm:$0xff] %v540
    %559 = vst [vmem:[#allocation2 + $0x78] sm:$0xff] %v542
    %v560 = vld [vmem:[%s2] sm:$0xff]
    %v561 = vld [vmem:[%s2 + $0x8] sm:$0xff]
    %v562 = vld [vmem:[%s2 + $0x10] sm:$0xff]
    %v563 = vld [vmem:[%s2 + $0x18] sm:$0xff]
    %v564 = vld [vmem:[%s2 + $0x20] sm:$0xff]
    %v565 = vld [vmem:[%s2 + $0x28] sm:$0xff]
    %v566 = vld [vmem:[%s2 + $0x30] sm:$0xff]
    %v567 = vld [vmem:[%s2 + $0x38] sm:$0xff]
    %v568 = vld [vmem:[%s2 + $0x40] sm:$0xff]
    %v569 = vld [vmem:[%s2 + $0x48] sm:$0xff]
    %v570 = vld [vmem:[%s2 + $0x50] sm:$0xff]
    %v571 = vld [vmem:[%s2 + $0x58] sm:$0xff]
    %v572 = vld [vmem:[#allocation2] sm:$0xff]
    %v573 = vld [vmem:[#allocation2 + $0x8] sm:$0xff]
    %v574 = vld [vmem:[#allocation2 + $0x10] sm:$0xff]
    %v575 = vld [vmem:[#allocation2 + $0x18] sm:$0xff]
    %v576 = vld [vmem:[#allocation2 + $0x20] sm:$0xff]
    %v577 = vld [vmem:[#allocation2 + $0x28] sm:$0xff]
    %v578 = vld [vmem:[#allocation2 + $0x30] sm:$0xff]
    %v579 = vld [vmem:[#allocation2 + $0x38] sm:$0xff]
    %v580 = vld [vmem:[#allocation2 + $0x40] sm:$0xff]
    %v581 = vld [vmem:[#allocation2 + $0x48] sm:$0xff]
    %v582 = vld [vmem:[#allocation2 + $0x50] sm:$0xff]
    %v583 = vld [vmem:[#allocation2 + $0x58] sm:$0xff]
    %v584 = vld [vmem:[#allocation2 + $0x60] sm:$0xff]
    %v585 = vld [vmem:[#allocation2 + $0x68] sm:$0xff]
    %v586 = vld [vmem:[#allocation2 + $0x70] sm:$0xff]
    %v587 = vld [vmem:[#allocation2 + $0x78] sm:$0xff]
    %v588 = vld [vmem:[%s3] sm:$0xff]
    %v589 = vld [vmem:[%s3 + $0x8] sm:$0xff]
    %v590 = vld [vmem:[%s3 + $0x10] sm:$0xff]
    %v591 = vld [vmem:[%s3 + $0x18] sm:$0xff]
    %v592 = vld [vmem:[%s3 + $0x20] sm:$0xff]
    %v593 = vld [vmem:[%s3 + $0x28] sm:$0xff]
    %v594 = vld [vmem:[%s3 + $0x30] sm:$0xff]
    %v595 = vld [vmem:[%s3 + $0x38] sm:$0xff]
    %v596 = vld [vmem:[%s3 + $0x40] sm:$0xff]
    %v597 = vld [vmem:[%s3 + $0x48] sm:$0xff]
    %v598 = vld [vmem:[%s3 + $0x50] sm:$0xff]
    %v599 = vld [vmem:[%s3 + $0x58] sm:$0xff]
    %601 = vset.pattern.permute.xlu0 0
    %602 = vperm.xlu0 %601, %v588
    %v603 = vpop.permute.xlu0 %602
    %606 = vset.pattern.permute.xlu0 0
    %607 = vperm.xlu0 %606, %v589
    %v608 = vpop.permute.xlu0 %607
    %611 = vset.pattern.permute.xlu0 0
    %612 = vperm.xlu0 %611, %v590
    %v613 = vpop.permute.xlu0 %612
    %616 = vset.pattern.permute.xlu0 0
    %617 = vperm.xlu0 %616, %v591
    %v618 = vpop.permute.xlu0 %617
    %621 = vset.pattern.permute.xlu0 0
    %622 = vperm.xlu0 %621, %v592
    %v623 = vpop.permute.xlu0 %622
    %626 = vset.pattern.permute.xlu0 0
    %627 = vperm.xlu0 %626, %v593
    %v628 = vpop.permute.xlu0 %627
    %631 = vset.pattern.permute.xlu0 0
    %632 = vperm.xlu0 %631, %v594
    %v633 = vpop.permute.xlu0 %632
    %636 = vset.pattern.permute.xlu0 0
    %637 = vperm.xlu0 %636, %v595
    %v638 = vpop.permute.xlu0 %637
    %641 = vset.pattern.permute.xlu0 0
    %642 = vperm.xlu0 %641, %v596
    %v643 = vpop.permute.xlu0 %642
    %646 = vset.pattern.permute.xlu0 0
    %647 = vperm.xlu0 %646, %v597
    %v648 = vpop.permute.xlu0 %647
    %651 = vset.pattern.permute.xlu0 0
    %652 = vperm.xlu0 %651, %v598
    %v653 = vpop.permute.xlu0 %652
    %656 = vset.pattern.permute.xlu0 0
    %657 = vperm.xlu0 %656, %v599
    %v658 = vpop.permute.xlu0 %657
    %660 = vmatprep.subr.mxu0 0.0
    %661 = vmatpush1.msra.mxu0 %v572
    %662 = vmatprep.subr.mxu0 0.0
    %663 = vmatpush1.msra.mxu0 %v573
    %664 = vmatprep.subr.mxu0 0.0
    %665 = vmatpush1.msra.mxu0 %v574
    %666 = vmatprep.subr.mxu0 0.0
    %667 = vmatpush1.msra.mxu0 %v575
    %668 = vmatprep.subr.mxu0 0.0
    %669 = vmatpush1.msra.mxu0 %v576
    %670 = vmatprep.subr.mxu0 0.0
    %671 = vmatpush1.msra.mxu0 %v577
    %672 = vmatprep.subr.mxu0 0.0
    %673 = vmatpush1.msra.mxu0 %v578
    %674 = vmatprep.subr.mxu0 0.0
    %675 = vmatpush1.msra.mxu0 %v579
    %676 = vmatprep.subr.mxu0 0.0
    %677 = vmatpush1.msra.mxu0 %v580
    %678 = vmatprep.subr.mxu0 0.0
    %679 = vmatpush1.msra.mxu0 %v581
    %680 = vmatprep.subr.mxu0 0.0
    %681 = vmatpush1.msra.mxu0 %v582
    %682 = vmatprep.subr.mxu0 0.0
    %683 = vmatpush1.msra.mxu0 %v583
    %684 = vmatprep.subr.mxu0 0.0
    %685 = vmatpush1.msra.mxu0 %v584
    %686 = vmatprep.subr.mxu0 0.0
    %687 = vmatpush1.msra.mxu0 %v585
    %688 = vmatprep.subr.mxu0 0.0
    %689 = vmatpush1.msra.mxu0 %v586
    %690 = vmatprep.subr.mxu0 0.0
    %691 = vmatpush1.msra.mxu0 %v587
    %692 = vmatprep.subr.mxu0 0.0
    %693 = vmatpush1.msra.mxu0 0.0
    %694 = vmatprep.subr.mxu0 0.0
    %695 = vmatpush1.msra.mxu0 0.0
    %696 = vmatprep.subr.mxu0 0.0
    %697 = vmatpush1.msra.mxu0 0.0
    %698 = vmatprep.subr.mxu0 0.0
    %699 = vmatpush1.msra.mxu0 0.0
    %700 = vmatprep.subr.mxu0 0.0
    %701 = vmatpush1.msra.mxu0 0.0
    %702 = vmatprep.subr.mxu0 0.0
    %703 = vmatpush1.msra.mxu0 0.0
    %704 = vmatprep.subr.mxu0 0.0
    %705 = vmatpush1.msra.mxu0 0.0
    %706 = vmatprep.subr.mxu0 0.0
    %707 = vmatpush1.msra.mxu0 0.0
    %708 = vmatprep.subr.mxu0 0.0
    %709 = vmatpush1.msra.mxu0 0.0
    %710 = vmatprep.subr.mxu0 0.0
    %711 = vmatpush1.msra.mxu0 0.0
    %712 = vmatprep.subr.mxu0 0.0
    %713 = vmatpush1.msra.mxu0 0.0
    %714 = vmatprep.subr.mxu0 0.0
    %715 = vmatpush1.msra.mxu0 0.0
    %716 = vmatprep.subr.mxu0 0.0
    %717 = vmatpush1.msra.mxu0 0.0
    %718 = vmatprep.subr.mxu0 0.0
    %719 = vmatpush1.msra.mxu0 0.0
    %720 = vmatprep.subr.mxu0 0.0
    %721 = vmatpush1.msra.mxu0 0.0
    %722 = vmatprep.subr.mxu0 0.0
    %723 = vmatpush1.msra.mxu0 0.0
    %724 = vmatprep.mubr.f32.mxu0 0.0
    %725 = vmatmul.mubr.f32.gmra.mrb[0].mxu0 %v560
    %v726 = vpop.f32.mrb[0].mxu0
    %v727 = vadd.f32 %v603, %v726
    %v728 = vpop.f32.mrb[0].mxu0
    %729 = vmatprep.mubr.f32.mxu0 0.0
    %730 = vmatmul.mubr.f32.gmra.mrb[0].mxu0 %v561
    %v731 = vpop.f32.mrb[0].mxu0
    %v732 = vadd.f32 %v608, %v731
    %v733 = vpop.f32.mrb[0].mxu0
    %734 = vmatprep.mubr.f32.mxu0 0.0
    %735 = vmatmul.mubr.f32.gmra.mrb[0].mxu0 %v562
    %v736 = vpop.f32.mrb[0].mxu0
    %v737 = vadd.f32 %v613, %v736
    %v738 = vpop.f32.mrb[0].mxu0
    %739 = vmatprep.mubr.f32.mxu0 0.0
    %740 = vmatmul.mubr.f32.gmra.mrb[0].mxu0 %v563
    %v741 = vpop.f32.mrb[0].mxu0
    %v742 = vadd.f32 %v618, %v741
    %v743 = vpop.f32.mrb[0].mxu0
    %744 = vmatprep.mubr.f32.mxu0 0.0
    %745 = vmatmul.mubr.f32.gmra.mrb[0].mxu0 %v564
    %v746 = vpop.f32.mrb[0].mxu0
    %v747 = vadd.f32 %v623, %v746
    %v748 = vpop.f32.mrb[0].mxu0
    %749 = vmatprep.mubr.f32.mxu0 0.0
    %750 = vmatmul.mubr.f32.gmra.mrb[0].mxu0 %v565
    %v751 = vpop.f32.mrb[0].mxu0
    %v752 = vadd.f32 %v628, %v751
    %v753 = vpop.f32.mrb[0].mxu0
    %754 = vmatprep.mubr.f32.mxu0 0.0
    %755 = vmatmul.mubr.f32.gmra.mrb[0].mxu0 %v566
    %v756 = vpop.f32.mrb[0].mxu0
    %v757 = vadd.f32 %v633, %v756
    %v758 = vpop.f32.mrb[0].mxu0
    %759 = vmatprep.mubr.f32.mxu0 0.0
    %760 = vmatmul.mubr.f32.gmra.mrb[0].mxu0 %v567
    %v761 = vpop.f32.mrb[0].mxu0
    %v762 = vadd.f32 %v638, %v761
    %v763 = vpop.f32.mrb[0].mxu0
    %764 = vmatprep.mubr.f32.mxu0 0.0
    %765 = vmatmul.mubr.f32.gmra.mrb[0].mxu0 %v568
    %v766 = vpop.f32.mrb[0].mxu0
    %v767 = vadd.f32 %v643, %v766
    %v768 = vpop.f32.mrb[0].mxu0
    %769 = vmatprep.mubr.f32.mxu0 0.0
    %770 = vmatmul.mubr.f32.gmra.mrb[0].mxu0 %v569
    %v771 = vpop.f32.mrb[0].mxu0
    %v772 = vadd.f32 %v648, %v771
    %v773 = vpop.f32.mrb[0].mxu0
    %774 = vmatprep.mubr.f32.mxu0 0.0
    %775 = vmatmul.mubr.f32.gmra.mrb[0].mxu0 %v570
    %v776 = vpop.f32.mrb[0].mxu0
    %v777 = vadd.f32 %v653, %v776
    %v778 = vpop.f32.mrb[0].mxu0
    %779 = vmatprep.mubr.f32.mxu0 0.0
    %780 = vmatmul.mubr.f32.gmra.mrb[0].mxu0 %v571
    %v781 = vpop.f32.mrb[0].mxu0
    %v782 = vadd.f32 %v658, %v781
    %v783 = vpop.f32.mrb[0].mxu0
    %784 = vdwg.mxu0
    %vm785 = vcmp.gt.f32.partialorder %v727, 0.0
    %vm786 = vcmp.gt.f32.partialorder %v732, 0.0
    %vm787 = vcmp.gt.f32.partialorder %v737, 0.0
    %vm788 = vcmp.gt.f32.partialorder %v742, 0.0
    %vm789 = vcmp.gt.f32.partialorder %v747, 0.0
    %vm790 = vcmp.gt.f32.partialorder %v752, 0.0
    %vm791 = vcmp.gt.f32.partialorder %v757, 0.0
    %vm792 = vcmp.gt.f32.partialorder %v762, 0.0
    %vm793 = vcmp.gt.f32.partialorder %v767, 0.0
    %vm794 = vcmp.gt.f32.partialorder %v772, 0.0
    %vm795 = vcmp.gt.f32.partialorder %v777, 0.0
    %vm796 = vcmp.gt.f32.partialorder %v782, 0.0
    %v797 = vmin.f32 %v727, 0.0
    %v798 = vmin.f32 %v732, 0.0
    %v799 = vmin.f32 %v737, 0.0
    %v800 = vmin.f32 %v742, 0.0
    %v801 = vmin.f32 %v747, 0.0
    %v802 = vmin.f32 %v752, 0.0
    %v803 = vmin.f32 %v757, 0.0
    %v804 = vmin.f32 %v762, 0.0
    %v805 = vmin.f32 %v767, 0.0
    %v806 = vmin.f32 %v772, 0.0
    %v807 = vmin.f32 %v777, 0.0
    %v808 = vmin.f32 %v782, 0.0
    %v809 = vmul.f32 %v797, 1.442695
    %v810 = vpow.pop %v809
    %v811 = vmul.f32 %v798, 1.442695
    %v812 = vpow.pop %v811
    %v813 = vmul.f32 %v799, 1.442695
    %v814 = vpow.pop %v813
    %v815 = vmul.f32 %v800, 1.442695
    %v816 = vpow.pop %v815
    %v817 = vmul.f32 %v801, 1.442695
    %v818 = vpow.pop %v817
    %v819 = vmul.f32 %v802, 1.442695
    %v820 = vpow.pop %v819
    %v821 = vmul.f32 %v803, 1.442695
    %v822 = vpow.pop %v821
    %v823 = vmul.f32 %v804, 1.442695
    %v824 = vpow.pop %v823
    %v825 = vmul.f32 %v805, 1.442695
    %v826 = vpow.pop %v825
    %v827 = vmul.f32 %v806, 1.442695
    %v828 = vpow.pop %v827
    %v829 = vmul.f32 %v807, 1.442695
    %v830 = vpow.pop %v829
    %v831 = vmul.f32 %v808, 1.442695
    %v832 = vpow.pop %v831
    %v833 = vsub.f32 %v810, 1.0
    %v834 = vsub.f32 %v812, 1.0
    %v835 = vsub.f32 %v814, 1.0
    %v836 = vsub.f32 %v816, 1.0
    %v837 = vsub.f32 %v818, 1.0
    %v838 = vsub.f32 %v820, 1.0
    %v839 = vsub.f32 %v822, 1.0
    %v840 = vsub.f32 %v824, 1.0
    %v841 = vsub.f32 %v826, 1.0
    %v842 = vsub.f32 %v828, 1.0
    %v843 = vsub.f32 %v830, 1.0
    %v844 = vsub.f32 %v832, 1.0
    %v845 = vsel %vm785, %v727, %v833
    %v846 = vsel %vm786, %v732, %v834
    %v847 = vsel %vm787, %v737, %v835
    %v848 = vsel %vm788, %v742, %v836
    %v849 = vsel %vm789, %v747, %v837
    %v850 = vsel %vm790, %v752, %v838
    %v851 = vsel %vm791, %v757, %v839
    %v852 = vsel %vm792, %v762, %v840
    %v853 = vsel %vm793, %v767, %v841
    %v854 = vsel %vm794, %v772, %v842
    %v855 = vsel %vm795, %v777, %v843
    %v856 = vsel %vm796, %v782, %v844
    %v857 = vld [vmem:[%s4] sm:$0xff]
    %v858 = vld [vmem:[%s4 + $0x8] sm:$0xff]
    %v859 = vld [vmem:[%s4 + $0x10] sm:$0xff]
    %v860 = vld [vmem:[%s4 + $0x18] sm:$0xff]
    %v861 = vld [vmem:[%s4 + $0x20] sm:$0xff]
    %v862 = vld [vmem:[%s4 + $0x28] sm:$0xff]
    %v863 = vld [vmem:[%s4 + $0x30] sm:$0xff]
    %v864 = vld [vmem:[%s4 + $0x38] sm:$0xff]
    %v865 = vld [vmem:[%s4 + $0x40] sm:$0xff]
    %v866 = vld [vmem:[%s4 + $0x48] sm:$0xff]
    %v867 = vld [vmem:[%s4 + $0x50] sm:$0xff]
    %v868 = vld [vmem:[%s4 + $0x58] sm:$0xff]
    %v869 = vld [vmem:[%s4 + $0x60] sm:$0xff]
    %v870 = vld [vmem:[%s4 + $0x68] sm:$0xff]
    %v871 = vld [vmem:[%s4 + $0x70] sm:$0xff]
    %v872 = vld [vmem:[%s4 + $0x78] sm:$0xff]
    %873 = vmatprep.subr.mxu0 0.0
    %874 = vmatpush1.msra.mxu0 %v857
    %875 = vmatprep.subr.mxu0 0.0
    %876 = vmatpush1.msra.mxu0 %v858
    %877 = vmatprep.subr.mxu0 0.0
    %878 = vmatpush1.msra.mxu0 %v859
    %879 = vmatprep.subr.mxu0 0.0
    %880 = vmatpush1.msra.mxu0 %v860
    %881 = vmatprep.subr.mxu0 0.0
    %882 = vmatpush1.msra.mxu0 %v861
    %883 = vmatprep.subr.mxu0 0.0
    %884 = vmatpush1.msra.mxu0 %v862
    %885 = vmatprep.subr.mxu0 0.0
    %886 = vmatpush1.msra.mxu0 %v863
    %887 = vmatprep.subr.mxu0 0.0
    %888 = vmatpush1.msra.mxu0 %v864
    %889 = vmatprep.subr.mxu0 0.0
    %890 = vmatpush1.msra.mxu0 %v865
    %891 = vmatprep.subr.mxu0 0.0
    %892 = vmatpush1.msra.mxu0 %v866
    %893 = vmatprep.subr.mxu0 0.0
    %894 = vmatpush1.msra.mxu0 %v867
    %895 = vmatprep.subr.mxu0 0.0
    %896 = vmatpush1.msra.mxu0 %v868
    %897 = vmatprep.subr.mxu0 0.0
    %898 = vmatpush1.msra.mxu0 %v869
    %899 = vmatprep.subr.mxu0 0.0
    %900 = vmatpush1.msra.mxu0 %v870
    %901 = vmatprep.subr.mxu0 0.0
    %902 = vmatpush1.msra.mxu0 %v871
    %903 = vmatprep.subr.mxu0 0.0
    %904 = vmatpush1.msra.mxu0 %v872
    %905 = vmatprep.subr.mxu0 0.0
    %906 = vmatpush1.msra.mxu0 0.0
    %907 = vmatprep.subr.mxu0 0.0
    %908 = vmatpush1.msra.mxu0 0.0
    %909 = vmatprep.subr.mxu0 0.0
    %910 = vmatpush1.msra.mxu0 0.0
    %911 = vmatprep.subr.mxu0 0.0
    %912 = vmatpush1.msra.mxu0 0.0
    %913 = vmatprep.subr.mxu0 0.0
    %914 = vmatpush1.msra.mxu0 0.0
    %915 = vmatprep.subr.mxu0 0.0
    %916 = vmatpush1.msra.mxu0 0.0
    %917 = vmatprep.subr.mxu0 0.0
    %918 = vmatpush1.msra.mxu0 0.0
    %919 = vmatprep.subr.mxu0 0.0
    %920 = vmatpush1.msra.mxu0 0.0
    %921 = vmatprep.subr.mxu0 0.0
    %922 = vmatpush1.msra.mxu0 0.0
    %923 = vmatprep.subr.mxu0 0.0
    %924 = vmatpush1.msra.mxu0 0.0
    %925 = vmatprep.subr.mxu0 0.0
    %926 = vmatpush1.msra.mxu0 0.0
    %927 = vmatprep.subr.mxu0 0.0
    %928 = vmatpush1.msra.mxu0 0.0
    %929 = vmatprep.subr.mxu0 0.0
    %930 = vmatpush1.msra.mxu0 0.0
    %931 = vmatprep.subr.mxu0 0.0
    %932 = vmatpush1.msra.mxu0 0.0
    %933 = vmatprep.subr.mxu0 0.0
    %934 = vmatpush1.msra.mxu0 0.0
    %935 = vmatprep.subr.mxu0 0.0
    %936 = vmatpush1.msra.mxu0 0.0
    %937 = vmatprep.mubr.f32.mxu0 0.0
    %938 = vmatmul.mubr.f32.gmra.mrb[0].mxu0 %v845
    %v939 = vpop.f32.mrb[0].mxu0
    %v940 = vadd.f32 0.0, %v939
    %v941 = vpop.f32.mrb[0].mxu0
    %942 = vmatprep.mubr.f32.mxu0 0.0
    %943 = vmatmul.mubr.f32.gmra.mrb[0].mxu0 %v846
    %v944 = vpop.f32.mrb[0].mxu0
    %v945 = vadd.f32 0.0, %v944
    %v946 = vpop.f32.mrb[0].mxu0
    %947 = vmatprep.mubr.f32.mxu0 0.0
    %948 = vmatmul.mubr.f32.gmra.mrb[0].mxu0 %v847
    %v949 = vpop.f32.mrb[0].mxu0
    %v950 = vadd.f32 0.0, %v949
    %v951 = vpop.f32.mrb[0].mxu0
    %952 = vmatprep.mubr.f32.mxu0 0.0
    %953 = vmatmul.mubr.f32.gmra.mrb[0].mxu0 %v848
    %v954 = vpop.f32.mrb[0].mxu0
    %v955 = vadd.f32 0.0, %v954
    %v956 = vpop.f32.mrb[0].mxu0
    %957 = vmatprep.mubr.f32.mxu0 0.0
    %958 = vmatmul.mubr.f32.gmra.mrb[0].mxu0 %v849
    %v959 = vpop.f32.mrb[0].mxu0
    %v960 = vadd.f32 0.0, %v959
    %v961 = vpop.f32.mrb[0].mxu0
    %962 = vmatprep.mubr.f32.mxu0 0.0
    %963 = vmatmul.mubr.f32.gmra.mrb[0].mxu0 %v850
    %v964 = vpop.f32.mrb[0].mxu0
    %v965 = vadd.f32 0.0, %v964
    %v966 = vpop.f32.mrb[0].mxu0
    %967 = vmatprep.mubr.f32.mxu0 0.0
    %968 = vmatmul.mubr.f32.gmra.mrb[0].mxu0 %v851
    %v969 = vpop.f32.mrb[0].mxu0
    %v970 = vadd.f32 0.0, %v969
    %v971 = vpop.f32.mrb[0].mxu0
    %972 = vmatprep.mubr.f32.mxu0 0.0
    %973 = vmatmul.mubr.f32.gmra.mrb[0].mxu0 %v852
    %v974 = vpop.f32.mrb[0].mxu0
    %v975 = vadd.f32 0.0, %v974
    %v976 = vpop.f32.mrb[0].mxu0
    %977 = vmatprep.mubr.f32.mxu0 0.0
    %978 = vmatmul.mubr.f32.gmra.mrb[0].mxu0 %v853
    %v979 = vpop.f32.mrb[0].mxu0
    %v980 = vadd.f32 0.0, %v979
    %v981 = vpop.f32.mrb[0].mxu0
    %982 = vmatprep.mubr.f32.mxu0 0.0
    %983 = vmatmul.mubr.f32.gmra.mrb[0].mxu0 %v854
    %v984 = vpop.f32.mrb[0].mxu0
    %v985 = vadd.f32 0.0, %v984
    %v986 = vpop.f32.mrb[0].mxu0
    %987 = vmatprep.mubr.f32.mxu0 0.0
    %988 = vmatmul.mubr.f32.gmra.mrb[0].mxu0 %v855
    %v989 = vpop.f32.mrb[0].mxu0
    %v990 = vadd.f32 0.0, %v989
    %v991 = vpop.f32.mrb[0].mxu0
    %992 = vmatprep.mubr.f32.mxu0 0.0
    %993 = vmatmul.mubr.f32.gmra.mrb[0].mxu0 %v856
    %v994 = vpop.f32.mrb[0].mxu0
    %v995 = vadd.f32 0.0, %v994
    %v996 = vpop.f32.mrb[0].mxu0
    %997 = vdwg.mxu0
    %v998 = vld [vmem:[%s5] sm:$0xff]
    %v999 = vld [vmem:[%s5 + $0x8] sm:$0xff]
    %v1000 = vld [vmem:[%s5 + $0x10] sm:$0xff]
    %v1001 = vld [vmem:[%s5 + $0x18] sm:$0xff]
    %v1002 = vld [vmem:[%s5 + $0x20] sm:$0xff]
    %v1003 = vld [vmem:[%s5 + $0x28] sm:$0xff]
    %v1004 = vld [vmem:[%s5 + $0x30] sm:$0xff]
    %v1005 = vld [vmem:[%s5 + $0x38] sm:$0xff]
    %v1006 = vld [vmem:[%s5 + $0x40] sm:$0xff]
    %v1007 = vld [vmem:[%s5 + $0x48] sm:$0xff]
    %v1008 = vld [vmem:[%s5 + $0x50] sm:$0xff]
    %v1009 = vld [vmem:[%s5 + $0x58] sm:$0xff]
    %1011 = vset.pattern.permute.xlu0 0
    %1012 = vperm.xlu0 %1011, %v998
    %v1013 = vpop.permute.xlu0 %1012
    %1016 = vset.pattern.permute.xlu0 0
    %1017 = vperm.xlu0 %1016, %v999
    %v1018 = vpop.permute.xlu0 %1017
    %1021 = vset.pattern.permute.xlu0 0
    %1022 = vperm.xlu0 %1021, %v1000
    %v1023 = vpop.permute.xlu0 %1022
    %1026 = vset.pattern.permute.xlu0 0
    %1027 = vperm.xlu0 %1026, %v1001
    %v1028 = vpop.permute.xlu0 %1027
    %1031 = vset.pattern.permute.xlu0 0
    %1032 = vperm.xlu0 %1031, %v1002
    %v1033 = vpop.permute.xlu0 %1032
    %1036 = vset.pattern.permute.xlu0 0
    %1037 = vperm.xlu0 %1036, %v1003
    %v1038 = vpop.permute.xlu0 %1037
    %1041 = vset.pattern.permute.xlu0 0
    %1042 = vperm.xlu0 %1041, %v1004
    %v1043 = vpop.permute.xlu0 %1042
    %1046 = vset.pattern.permute.xlu0 0
    %1047 = vperm.xlu0 %1046, %v1005
    %v1048 = vpop.permute.xlu0 %1047
    %1051 = vset.pattern.permute.xlu0 0
    %1052 = vperm.xlu0 %1051, %v1006
    %v1053 = vpop.permute.xlu0 %1052
    %1056 = vset.pattern.permute.xlu0 0
    %1057 = vperm.xlu0 %1056, %v1007
    %v1058 = vpop.permute.xlu0 %1057
    %1061 = vset.pattern.permute.xlu0 0
    %1062 = vperm.xlu0 %1061, %v1008
    %v1063 = vpop.permute.xlu0 %1062
    %1066 = vset.pattern.permute.xlu0 0
    %1067 = vperm.xlu0 %1066, %v1009
    %v1068 = vpop.permute.xlu0 %1067
    %v1070 = vmul.f32 %v1013, %v940
    %v1071 = vmul.f32 %v1018, %v945
    %v1072 = vmul.f32 %v1023, %v950
    %v1073 = vmul.f32 %v1028, %v955
    %v1074 = vmul.f32 %v1033, %v960
    %v1075 = vmul.f32 %v1038, %v965
    %v1076 = vmul.f32 %v1043, %v970
    %v1077 = vmul.f32 %v1048, %v975
    %v1078 = vmul.f32 %v1053, %v980
    %v1079 = vmul.f32 %v1058, %v985
    %v1080 = vmul.f32 %v1063, %v990
    %v1081 = vmul.f32 %v1068, %v995
    %v1082 = vadd.f32 %v1070, 0.0
    %v1083 = vadd.f32 %v1071, 0.0
    %v1084 = vadd.f32 %v1072, 0.0
    %v1085 = vadd.f32 %v1073, 0.0
    %v1086 = vadd.f32 %v1074, 0.0
    %v1087 = vadd.f32 %v1075, 0.0
    %v1088 = vadd.f32 %v1076, 0.0
    %v1089 = vadd.f32 %v1077, 0.0
    %v1090 = vadd.f32 %v1078, 0.0
    %v1091 = vadd.f32 %v1079, 0.0
    %v1092 = vadd.f32 %v1080, 0.0
    %v1093 = vadd.f32 %v1081, 0.0
    %1094 = vset.pattern.permute.xlu0 1
    %1095 = vperm.xlu0 %1094, %v998
    %v1096 = vpop.permute.xlu0 %1095
    %1098 = vset.pattern.permute.xlu0 1
    %1099 = vperm.xlu0 %1098, %v999
    %v1100 = vpop.permute.xlu0 %1099
    %1102 = vset.pattern.permute.xlu0 1
    %1103 = vperm.xlu0 %1102, %v1000
    %v1104 = vpop.permute.xlu0 %1103
    %1106 = vset.pattern.permute.xlu0 1
    %1107 = vperm.xlu0 %1106, %v1001
    %v1108 = vpop.permute.xlu0 %1107
    %1110 = vset.pattern.permute.xlu0 1
    %1111 = vperm.xlu0 %1110, %v1002
    %v1112 = vpop.permute.xlu0 %1111
    %1114 = vset.pattern.permute.xlu0 1
    %1115 = vperm.xlu0 %1114, %v1003
    %v1116 = vpop.permute.xlu0 %1115
    %1118 = vset.pattern.permute.xlu0 1
    %1119 = vperm.xlu0 %1118, %v1004
    %v1120 = vpop.permute.xlu0 %1119
    %1122 = vset.pattern.permute.xlu0 1
    %1123 = vperm.xlu0 %1122, %v1005
    %v1124 = vpop.permute.xlu0 %1123
    %1126 = vset.pattern.permute.xlu0 1
    %1127 = vperm.xlu0 %1126, %v1006
    %v1128 = vpop.permute.xlu0 %1127
    %1130 = vset.pattern.permute.xlu0 1
    %1131 = vperm.xlu0 %1130, %v1007
    %v1132 = vpop.permute.xlu0 %1131
    %1134 = vset.pattern.permute.xlu0 1
    %1135 = vperm.xlu0 %1134, %v1008
    %v1136 = vpop.permute.xlu0 %1135
    %1138 = vset.pattern.permute.xlu0 1
    %1139 = vperm.xlu0 %1138, %v1009
    %v1140 = vpop.permute.xlu0 %1139
    %v1142 = vmul.f32 %v1096, %v940
    %v1143 = vmul.f32 %v1100, %v945
    %v1144 = vmul.f32 %v1104, %v950
    %v1145 = vmul.f32 %v1108, %v955
    %v1146 = vmul.f32 %v1112, %v960
    %v1147 = vmul.f32 %v1116, %v965
    %v1148 = vmul.f32 %v1120, %v970
    %v1149 = vmul.f32 %v1124, %v975
    %v1150 = vmul.f32 %v1128, %v980
    %v1151 = vmul.f32 %v1132, %v985
    %v1152 = vmul.f32 %v1136, %v990
    %v1153 = vmul.f32 %v1140, %v995
    %1166 = vrot.lane.b32.xlu0 %v1142, 127
    %v1167 = vpop.permute.xlu0 %1166
    %1168 = vrot.lane.b32.xlu0 %v1143, 127
    %v1169 = vpop.permute.xlu0 %1168
    %1170 = vrot.lane.b32.xlu0 %v1144, 127
    %v1171 = vpop.permute.xlu0 %1170
    %1172 = vrot.lane.b32.xlu0 %v1145, 127
    %v1173 = vpop.permute.xlu0 %1172
    %1174 = vrot.lane.b32.xlu0 %v1146, 127
    %v1175 = vpop.permute.xlu0 %1174
    %1176 = vrot.lane.b32.xlu0 %v1147, 127
    %v1177 = vpop.permute.xlu0 %1176
    %1178 = vrot.lane.b32.xlu0 %v1148, 127
    %v1179 = vpop.permute.xlu0 %1178
    %1180 = vrot.lane.b32.xlu0 %v1149, 127
    %v1181 = vpop.permute.xlu0 %1180
    %1182 = vrot.lane.b32.xlu0 %v1150, 127
    %v1183 = vpop.permute.xlu0 %1182
    %1184 = vrot.lane.b32.xlu0 %v1151, 127
    %v1185 = vpop.permute.xlu0 %1184
    %1186 = vrot.lane.b32.xlu0 %v1152, 127
    %v1187 = vpop.permute.xlu0 %1186
    %1188 = vrot.lane.b32.xlu0 %v1153, 127
    %v1189 = vpop.permute.xlu0 %1188
    %v1202 = vadd.f32 %v1082, %v1167
    %v1203 = vadd.f32 %v1083, %v1169
    %v1204 = vadd.f32 %v1084, %v1171
    %v1205 = vadd.f32 %v1085, %v1173
    %v1206 = vadd.f32 %v1086, %v1175
    %v1207 = vadd.f32 %v1087, %v1177
    %v1208 = vadd.f32 %v1088, %v1179
    %v1209 = vadd.f32 %v1089, %v1181
    %v1210 = vadd.f32 %v1090, %v1183
    %v1211 = vadd.f32 %v1091, %v1185
    %v1212 = vadd.f32 %v1092, %v1187
    %v1213 = vadd.f32 %v1093, %v1189
    %1214 = vset.pattern.permute.xlu0 2
    %1215 = vperm.xlu0 %1214, %v998
    %v1216 = vpop.permute.xlu0 %1215
    %1218 = vset.pattern.permute.xlu0 2
    %1219 = vperm.xlu0 %1218, %v999
    %v1220 = vpop.permute.xlu0 %1219
    %1222 = vset.pattern.permute.xlu0 2
    %1223 = vperm.xlu0 %1222, %v1000
    %v1224 = vpop.permute.xlu0 %1223
    %1226 = vset.pattern.permute.xlu0 2
    %1227 = vperm.xlu0 %1226, %v1001
    %v1228 = vpop.permute.xlu0 %1227
    %1230 = vset.pattern.permute.xlu0 2
    %1231 = vperm.xlu0 %1230, %v1002
    %v1232 = vpop.permute.xlu0 %1231
    %1234 = vset.pattern.permute.xlu0 2
    %1235 = vperm.xlu0 %1234, %v1003
    %v1236 = vpop.permute.xlu0 %1235
    %1238 = vset.pattern.permute.xlu0 2
    %1239 = vperm.xlu0 %1238, %v1004
    %v1240 = vpop.permute.xlu0 %1239
    %1242 = vset.pattern.permute.xlu0 2
    %1243 = vperm.xlu0 %1242, %v1005
    %v1244 = vpop.permute.xlu0 %1243
    %1246 = vset.pattern.permute.xlu0 2
    %1247 = vperm.xlu0 %1246, %v1006
    %v1248 = vpop.permute.xlu0 %1247
    %1250 = vset.pattern.permute.xlu0 2
    %1251 = vperm.xlu0 %1250, %v1007
    %v1252 = vpop.permute.xlu0 %1251
    %1254 = vset.pattern.permute.xlu0 2
    %1255 = vperm.xlu0 %1254, %v1008
    %v1256 = vpop.permute.xlu0 %1255
    %1258 = vset.pattern.permute.xlu0 2
    %1259 = vperm.xlu0 %1258, %v1009
    %v1260 = vpop.permute.xlu0 %1259
    %v1262 = vmul.f32 %v1216, %v940
    %v1263 = vmul.f32 %v1220, %v945
    %v1264 = vmul.f32 %v1224, %v950
    %v1265 = vmul.f32 %v1228, %v955
    %v1266 = vmul.f32 %v1232, %v960
    %v1267 = vmul.f32 %v1236, %v965
    %v1268 = vmul.f32 %v1240, %v970
    %v1269 = vmul.f32 %v1244, %v975
    %v1270 = vmul.f32 %v1248, %v980
    %v1271 = vmul.f32 %v1252, %v985
    %v1272 = vmul.f32 %v1256, %v990
    %v1273 = vmul.f32 %v1260, %v995
    %1286 = vrot.lane.b32.xlu0 %v1262, 126
    %v1287 = vpop.permute.xlu0 %1286
    %1288 = vrot.lane.b32.xlu0 %v1263, 126
    %v1289 = vpop.permute.xlu0 %1288
    %1290 = vrot.lane.b32.xlu0 %v1264, 126
    %v1291 = vpop.permute.xlu0 %1290
    %1292 = vrot.lane.b32.xlu0 %v1265, 126
    %v1293 = vpop.permute.xlu0 %1292
    %1294 = vrot.lane.b32.xlu0 %v1266, 126
    %v1295 = vpop.permute.xlu0 %1294
    %1296 = vrot.lane.b32.xlu0 %v1267, 126
    %v1297 = vpop.permute.xlu0 %1296
    %1298 = vrot.lane.b32.xlu0 %v1268, 126
    %v1299 = vpop.permute.xlu0 %1298
    %1300 = vrot.lane.b32.xlu0 %v1269, 126
    %v1301 = vpop.permute.xlu0 %1300
    %1302 = vrot.lane.b32.xlu0 %v1270, 126
    %v1303 = vpop.permute.xlu0 %1302
    %1304 = vrot.lane.b32.xlu0 %v1271, 126
    %v1305 = vpop.permute.xlu0 %1304
    %1306 = vrot.lane.b32.xlu0 %v1272, 126
    %v1307 = vpop.permute.xlu0 %1306
    %1308 = vrot.lane.b32.xlu0 %v1273, 126
    %v1309 = vpop.permute.xlu0 %1308
    %v1322 = vadd.f32 %v1202, %v1287
    %v1323 = vadd.f32 %v1203, %v1289
    %v1324 = vadd.f32 %v1204, %v1291
    %v1325 = vadd.f32 %v1205, %v1293
    %v1326 = vadd.f32 %v1206, %v1295
    %v1327 = vadd.f32 %v1207, %v1297
    %v1328 = vadd.f32 %v1208, %v1299
    %v1329 = vadd.f32 %v1209, %v1301
    %v1330 = vadd.f32 %v1210, %v1303
    %v1331 = vadd.f32 %v1211, %v1305
    %v1332 = vadd.f32 %v1212, %v1307
    %v1333 = vadd.f32 %v1213, %v1309
    %1334 = vset.pattern.permute.xlu0 3
    %1335 = vperm.xlu0 %1334, %v998
    %v1336 = vpop.permute.xlu0 %1335
    %1338 = vset.pattern.permute.xlu0 3
    %1339 = vperm.xlu0 %1338, %v999
    %v1340 = vpop.permute.xlu0 %1339
    %1342 = vset.pattern.permute.xlu0 3
    %1343 = vperm.xlu0 %1342, %v1000
    %v1344 = vpop.permute.xlu0 %1343
    %1346 = vset.pattern.permute.xlu0 3
    %1347 = vperm.xlu0 %1346, %v1001
    %v1348 = vpop.permute.xlu0 %1347
    %1350 = vset.pattern.permute.xlu0 3
    %1351 = vperm.xlu0 %1350, %v1002
    %v1352 = vpop.permute.xlu0 %1351
    %1354 = vset.pattern.permute.xlu0 3
    %1355 = vperm.xlu0 %1354, %v1003
    %v1356 = vpop.permute.xlu0 %1355
    %1358 = vset.pattern.permute.xlu0 3
    %1359 = vperm.xlu0 %1358, %v1004
    %v1360 = vpop.permute.xlu0 %1359
    %1362 = vset.pattern.permute.xlu0 3
    %1363 = vperm.xlu0 %1362, %v1005
    %v1364 = vpop.permute.xlu0 %1363
    %1366 = vset.pattern.permute.xlu0 3
    %1367 = vperm.xlu0 %1366, %v1006
    %v1368 = vpop.permute.xlu0 %1367
    %1370 = vset.pattern.permute.xlu0 3
    %1371 = vperm.xlu0 %1370, %v1007
    %v1372 = vpop.permute.xlu0 %1371
    %1374 = vset.pattern.permute.xlu0 3
    %1375 = vperm.xlu0 %1374, %v1008
    %v1376 = vpop.permute.xlu0 %1375
    %1378 = vset.pattern.permute.xlu0 3
    %1379 = vperm.xlu0 %1378, %v1009
    %v1380 = vpop.permute.xlu0 %1379
    %v1382 = vmul.f32 %v1336, %v940
    %v1383 = vmul.f32 %v1340, %v945
    %v1384 = vmul.f32 %v1344, %v950
    %v1385 = vmul.f32 %v1348, %v955
    %v1386 = vmul.f32 %v1352, %v960
    %v1387 = vmul.f32 %v1356, %v965
    %v1388 = vmul.f32 %v1360, %v970
    %v1389 = vmul.f32 %v1364, %v975
    %v1390 = vmul.f32 %v1368, %v980
    %v1391 = vmul.f32 %v1372, %v985
    %v1392 = vmul.f32 %v1376, %v990
    %v1393 = vmul.f32 %v1380, %v995
    %1406 = vrot.lane.b32.xlu0 %v1382, 125
    %v1407 = vpop.permute.xlu0 %1406
    %1408 = vrot.lane.b32.xlu0 %v1383, 125
    %v1409 = vpop.permute.xlu0 %1408
    %1410 = vrot.lane.b32.xlu0 %v1384, 125
    %v1411 = vpop.permute.xlu0 %1410
    %1412 = vrot.lane.b32.xlu0 %v1385, 125
    %v1413 = vpop.permute.xlu0 %1412
    %1414 = vrot.lane.b32.xlu0 %v1386, 125
    %v1415 = vpop.permute.xlu0 %1414
    %1416 = vrot.lane.b32.xlu0 %v1387, 125
    %v1417 = vpop.permute.xlu0 %1416
    %1418 = vrot.lane.b32.xlu0 %v1388, 125
    %v1419 = vpop.permute.xlu0 %1418
    %1420 = vrot.lane.b32.xlu0 %v1389, 125
    %v1421 = vpop.permute.xlu0 %1420
    %1422 = vrot.lane.b32.xlu0 %v1390, 125
    %v1423 = vpop.permute.xlu0 %1422
    %1424 = vrot.lane.b32.xlu0 %v1391, 125
    %v1425 = vpop.permute.xlu0 %1424
    %1426 = vrot.lane.b32.xlu0 %v1392, 125
    %v1427 = vpop.permute.xlu0 %1426
    %1428 = vrot.lane.b32.xlu0 %v1393, 125
    %v1429 = vpop.permute.xlu0 %1428
    %v1442 = vadd.f32 %v1322, %v1407
    %v1443 = vadd.f32 %v1323, %v1409
    %v1444 = vadd.f32 %v1324, %v1411
    %v1445 = vadd.f32 %v1325, %v1413
    %v1446 = vadd.f32 %v1326, %v1415
    %v1447 = vadd.f32 %v1327, %v1417
    %v1448 = vadd.f32 %v1328, %v1419
    %v1449 = vadd.f32 %v1329, %v1421
    %v1450 = vadd.f32 %v1330, %v1423
    %v1451 = vadd.f32 %v1331, %v1425
    %v1452 = vadd.f32 %v1332, %v1427
    %v1453 = vadd.f32 %v1333, %v1429
    %1454 = vset.pattern.permute.xlu0 4
    %1455 = vperm.xlu0 %1454, %v998
    %v1456 = vpop.permute.xlu0 %1455
    %1458 = vset.pattern.permute.xlu0 4
    %1459 = vperm.xlu0 %1458, %v999
    %v1460 = vpop.permute.xlu0 %1459
    %1462 = vset.pattern.permute.xlu0 4
    %1463 = vperm.xlu0 %1462, %v1000
    %v1464 = vpop.permute.xlu0 %1463
    %1466 = vset.pattern.permute.xlu0 4
    %1467 = vperm.xlu0 %1466, %v1001
    %v1468 = vpop.permute.xlu0 %1467
    %1470 = vset.pattern.permute.xlu0 4
    %1471 = vperm.xlu0 %1470, %v1002
    %v1472 = vpop.permute.xlu0 %1471
    %1474 = vset.pattern.permute.xlu0 4
    %1475 = vperm.xlu0 %1474, %v1003
    %v1476 = vpop.permute.xlu0 %1475
    %1478 = vset.pattern.permute.xlu0 4
    %1479 = vperm.xlu0 %1478, %v1004
    %v1480 = vpop.permute.xlu0 %1479
    %1482 = vset.pattern.permute.xlu0 4
    %1483 = vperm.xlu0 %1482, %v1005
    %v1484 = vpop.permute.xlu0 %1483
    %1486 = vset.pattern.permute.xlu0 4
    %1487 = vperm.xlu0 %1486, %v1006
    %v1488 = vpop.permute.xlu0 %1487
    %1490 = vset.pattern.permute.xlu0 4
    %1491 = vperm.xlu0 %1490, %v1007
    %v1492 = vpop.permute.xlu0 %1491
    %1494 = vset.pattern.permute.xlu0 4
    %1495 = vperm.xlu0 %1494, %v1008
    %v1496 = vpop.permute.xlu0 %1495
    %1498 = vset.pattern.permute.xlu0 4
    %1499 = vperm.xlu0 %1498, %v1009
    %v1500 = vpop.permute.xlu0 %1499
    %v1502 = vmul.f32 %v1456, %v940
    %v1503 = vmul.f32 %v1460, %v945
    %v1504 = vmul.f32 %v1464, %v950
    %v1505 = vmul.f32 %v1468, %v955
    %v1506 = vmul.f32 %v1472, %v960
    %v1507 = vmul.f32 %v1476, %v965
    %v1508 = vmul.f32 %v1480, %v970
    %v1509 = vmul.f32 %v1484, %v975
    %v1510 = vmul.f32 %v1488, %v980
    %v1511 = vmul.f32 %v1492, %v985
    %v1512 = vmul.f32 %v1496, %v990
    %v1513 = vmul.f32 %v1500, %v995
    %1526 = vrot.lane.b32.xlu0 %v1502, 124
    %v1527 = vpop.permute.xlu0 %1526
    %1528 = vrot.lane.b32.xlu0 %v1503, 124
    %v1529 = vpop.permute.xlu0 %1528
    %1530 = vrot.lane.b32.xlu0 %v1504, 124
    %v1531 = vpop.permute.xlu0 %1530
    %1532 = vrot.lane.b32.xlu0 %v1505, 124
    %v1533 = vpop.permute.xlu0 %1532
    %1534 = vrot.lane.b32.xlu0 %v1506, 124
    %v1535 = vpop.permute.xlu0 %1534
    %1536 = vrot.lane.b32.xlu0 %v1507, 124
    %v1537 = vpop.permute.xlu0 %1536
    %1538 = vrot.lane.b32.xlu0 %v1508, 124
    %v1539 = vpop.permute.xlu0 %1538
    %1540 = vrot.lane.b32.xlu0 %v1509, 124
    %v1541 = vpop.permute.xlu0 %1540
    %1542 = vrot.lane.b32.xlu0 %v1510, 124
    %v1543 = vpop.permute.xlu0 %1542
    %1544 = vrot.lane.b32.xlu0 %v1511, 124
    %v1545 = vpop.permute.xlu0 %1544
    %1546 = vrot.lane.b32.xlu0 %v1512, 124
    %v1547 = vpop.permute.xlu0 %1546
    %1548 = vrot.lane.b32.xlu0 %v1513, 124
    %v1549 = vpop.permute.xlu0 %1548
    %v1562 = vadd.f32 %v1442, %v1527
    %v1563 = vadd.f32 %v1443, %v1529
    %v1564 = vadd.f32 %v1444, %v1531
    %v1565 = vadd.f32 %v1445, %v1533
    %v1566 = vadd.f32 %v1446, %v1535
    %v1567 = vadd.f32 %v1447, %v1537
    %v1568 = vadd.f32 %v1448, %v1539
    %v1569 = vadd.f32 %v1449, %v1541
    %v1570 = vadd.f32 %v1450, %v1543
    %v1571 = vadd.f32 %v1451, %v1545
    %v1572 = vadd.f32 %v1452, %v1547
    %v1573 = vadd.f32 %v1453, %v1549
    %1574 = vset.pattern.permute.xlu0 5
    %1575 = vperm.xlu0 %1574, %v998
    %v1576 = vpop.permute.xlu0 %1575
    %1578 = vset.pattern.permute.xlu0 5
    %1579 = vperm.xlu0 %1578, %v999
    %v1580 = vpop.permute.xlu0 %1579
    %1582 = vset.pattern.permute.xlu0 5
    %1583 = vperm.xlu0 %1582, %v1000
    %v1584 = vpop.permute.xlu0 %1583
    %1586 = vset.pattern.permute.xlu0 5
    %1587 = vperm.xlu0 %1586, %v1001
    %v1588 = vpop.permute.xlu0 %1587
    %1590 = vset.pattern.permute.xlu0 5
    %1591 = vperm.xlu0 %1590, %v1002
    %v1592 = vpop.permute.xlu0 %1591
    %1594 = vset.pattern.permute.xlu0 5
    %1595 = vperm.xlu0 %1594, %v1003
    %v1596 = vpop.permute.xlu0 %1595
    %1598 = vset.pattern.permute.xlu0 5
    %1599 = vperm.xlu0 %1598, %v1004
    %v1600 = vpop.permute.xlu0 %1599
    %1602 = vset.pattern.permute.xlu0 5
    %1603 = vperm.xlu0 %1602, %v1005
    %v1604 = vpop.permute.xlu0 %1603
    %1606 = vset.pattern.permute.xlu0 5
    %1607 = vperm.xlu0 %1606, %v1006
    %v1608 = vpop.permute.xlu0 %1607
    %1610 = vset.pattern.permute.xlu0 5
    %1611 = vperm.xlu0 %1610, %v1007
    %v1612 = vpop.permute.xlu0 %1611
    %1614 = vset.pattern.permute.xlu0 5
    %1615 = vperm.xlu0 %1614, %v1008
    %v1616 = vpop.permute.xlu0 %1615
    %1618 = vset.pattern.permute.xlu0 5
    %1619 = vperm.xlu0 %1618, %v1009
    %v1620 = vpop.permute.xlu0 %1619
    %v1622 = vmul.f32 %v1576, %v940
    %v1623 = vmul.f32 %v1580, %v945
    %v1624 = vmul.f32 %v1584, %v950
    %v1625 = vmul.f32 %v1588, %v955
    %v1626 = vmul.f32 %v1592, %v960
    %v1627 = vmul.f32 %v1596, %v965
    %v1628 = vmul.f32 %v1600, %v970
    %v1629 = vmul.f32 %v1604, %v975
    %v1630 = vmul.f32 %v1608, %v980
    %v1631 = vmul.f32 %v1612, %v985
    %v1632 = vmul.f32 %v1616, %v990
    %v1633 = vmul.f32 %v1620, %v995
    %1646 = vrot.lane.b32.xlu0 %v1622, 123
    %v1647 = vpop.permute.xlu0 %1646
    %1648 = vrot.lane.b32.xlu0 %v1623, 123
    %v1649 = vpop.permute.xlu0 %1648
    %1650 = vrot.lane.b32.xlu0 %v1624, 123
    %v1651 = vpop.permute.xlu0 %1650
    %1652 = vrot.lane.b32.xlu0 %v1625, 123
    %v1653 = vpop.permute.xlu0 %1652
    %1654 = vrot.lane.b32.xlu0 %v1626, 123
    %v1655 = vpop.permute.xlu0 %1654
    %1656 = vrot.lane.b32.xlu0 %v1627, 123
    %v1657 = vpop.permute.xlu0 %1656
    %1658 = vrot.lane.b32.xlu0 %v1628, 123
    %v1659 = vpop.permute.xlu0 %1658
    %1660 = vrot.lane.b32.xlu0 %v1629, 123
    %v1661 = vpop.permute.xlu0 %1660
    %1662 = vrot.lane.b32.xlu0 %v1630, 123
    %v1663 = vpop.permute.xlu0 %1662
    %1664 = vrot.lane.b32.xlu0 %v1631, 123
    %v1665 = vpop.permute.xlu0 %1664
    %1666 = vrot.lane.b32.xlu0 %v1632, 123
    %v1667 = vpop.permute.xlu0 %1666
    %1668 = vrot.lane.b32.xlu0 %v1633, 123
    %v1669 = vpop.permute.xlu0 %1668
    %v1682 = vadd.f32 %v1562, %v1647
    %v1683 = vadd.f32 %v1563, %v1649
    %v1684 = vadd.f32 %v1564, %v1651
    %v1685 = vadd.f32 %v1565, %v1653
    %v1686 = vadd.f32 %v1566, %v1655
    %v1687 = vadd.f32 %v1567, %v1657
    %v1688 = vadd.f32 %v1568, %v1659
    %v1689 = vadd.f32 %v1569, %v1661
    %v1690 = vadd.f32 %v1570, %v1663
    %v1691 = vadd.f32 %v1571, %v1665
    %v1692 = vadd.f32 %v1572, %v1667
    %v1693 = vadd.f32 %v1573, %v1669
    %1694 = vset.pattern.permute.xlu0 6
    %1695 = vperm.xlu0 %1694, %v998
    %v1696 = vpop.permute.xlu0 %1695
    %1698 = vset.pattern.permute.xlu0 6
    %1699 = vperm.xlu0 %1698, %v999
    %v1700 = vpop.permute.xlu0 %1699
    %1702 = vset.pattern.permute.xlu0 6
    %1703 = vperm.xlu0 %1702, %v1000
    %v1704 = vpop.permute.xlu0 %1703
    %1706 = vset.pattern.permute.xlu0 6
    %1707 = vperm.xlu0 %1706, %v1001
    %v1708 = vpop.permute.xlu0 %1707
    %1710 = vset.pattern.permute.xlu0 6
    %1711 = vperm.xlu0 %1710, %v1002
    %v1712 = vpop.permute.xlu0 %1711
    %1714 = vset.pattern.permute.xlu0 6
    %1715 = vperm.xlu0 %1714, %v1003
    %v1716 = vpop.permute.xlu0 %1715
    %1718 = vset.pattern.permute.xlu0 6
    %1719 = vperm.xlu0 %1718, %v1004
    %v1720 = vpop.permute.xlu0 %1719
    %1722 = vset.pattern.permute.xlu0 6
    %1723 = vperm.xlu0 %1722, %v1005
    %v1724 = vpop.permute.xlu0 %1723
    %1726 = vset.pattern.permute.xlu0 6
    %1727 = vperm.xlu0 %1726, %v1006
    %v1728 = vpop.permute.xlu0 %1727
    %1730 = vset.pattern.permute.xlu0 6
    %1731 = vperm.xlu0 %1730, %v1007
    %v1732 = vpop.permute.xlu0 %1731
    %1734 = vset.pattern.permute.xlu0 6
    %1735 = vperm.xlu0 %1734, %v1008
    %v1736 = vpop.permute.xlu0 %1735
    %1738 = vset.pattern.permute.xlu0 6
    %1739 = vperm.xlu0 %1738, %v1009
    %v1740 = vpop.permute.xlu0 %1739
    %v1742 = vmul.f32 %v1696, %v940
    %v1743 = vmul.f32 %v1700, %v945
    %v1744 = vmul.f32 %v1704, %v950
    %v1745 = vmul.f32 %v1708, %v955
    %v1746 = vmul.f32 %v1712, %v960
    %v1747 = vmul.f32 %v1716, %v965
    %v1748 = vmul.f32 %v1720, %v970
    %v1749 = vmul.f32 %v1724, %v975
    %v1750 = vmul.f32 %v1728, %v980
    %v1751 = vmul.f32 %v1732, %v985
    %v1752 = vmul.f32 %v1736, %v990
    %v1753 = vmul.f32 %v1740, %v995
    %1766 = vrot.lane.b32.xlu0 %v1742, 122
    %v1767 = vpop.permute.xlu0 %1766
    %1768 = vrot.lane.b32.xlu0 %v1743, 122
    %v1769 = vpop.permute.xlu0 %1768
    %1770 = vrot.lane.b32.xlu0 %v1744, 122
    %v1771 = vpop.permute.xlu0 %1770
    %1772 = vrot.lane.b32.xlu0 %v1745, 122
    %v1773 = vpop.permute.xlu0 %1772
    %1774 = vrot.lane.b32.xlu0 %v1746, 122
    %v1775 = vpop.permute.xlu0 %1774
    %1776 = vrot.lane.b32.xlu0 %v1747, 122
    %v1777 = vpop.permute.xlu0 %1776
    %1778 = vrot.lane.b32.xlu0 %v1748, 122
    %v1779 = vpop.permute.xlu0 %1778
    %1780 = vrot.lane.b32.xlu0 %v1749, 122
    %v1781 = vpop.permute.xlu0 %1780
    %1782 = vrot.lane.b32.xlu0 %v1750, 122
    %v1783 = vpop.permute.xlu0 %1782
    %1784 = vrot.lane.b32.xlu0 %v1751, 122
    %v1785 = vpop.permute.xlu0 %1784
    %1786 = vrot.lane.b32.xlu0 %v1752, 122
    %v1787 = vpop.permute.xlu0 %1786
    %1788 = vrot.lane.b32.xlu0 %v1753, 122
    %v1789 = vpop.permute.xlu0 %1788
    %v1802 = vadd.f32 %v1682, %v1767
    %v1803 = vadd.f32 %v1683, %v1769
    %v1804 = vadd.f32 %v1684, %v1771
    %v1805 = vadd.f32 %v1685, %v1773
    %v1806 = vadd.f32 %v1686, %v1775
    %v1807 = vadd.f32 %v1687, %v1777
    %v1808 = vadd.f32 %v1688, %v1779
    %v1809 = vadd.f32 %v1689, %v1781
    %v1810 = vadd.f32 %v1690, %v1783
    %v1811 = vadd.f32 %v1691, %v1785
    %v1812 = vadd.f32 %v1692, %v1787
    %v1813 = vadd.f32 %v1693, %v1789
    %1814 = vset.pattern.permute.xlu0 7
    %1815 = vperm.xlu0 %1814, %v998
    %v1816 = vpop.permute.xlu0 %1815
    %1818 = vset.pattern.permute.xlu0 7
    %1819 = vperm.xlu0 %1818, %v999
    %v1820 = vpop.permute.xlu0 %1819
    %1822 = vset.pattern.permute.xlu0 7
    %1823 = vperm.xlu0 %1822, %v1000
    %v1824 = vpop.permute.xlu0 %1823
    %1826 = vset.pattern.permute.xlu0 7
    %1827 = vperm.xlu0 %1826, %v1001
    %v1828 = vpop.permute.xlu0 %1827
    %1830 = vset.pattern.permute.xlu0 7
    %1831 = vperm.xlu0 %1830, %v1002
    %v1832 = vpop.permute.xlu0 %1831
    %1834 = vset.pattern.permute.xlu0 7
    %1835 = vperm.xlu0 %1834, %v1003
    %v1836 = vpop.permute.xlu0 %1835
    %1838 = vset.pattern.permute.xlu0 7
    %1839 = vperm.xlu0 %1838, %v1004
    %v1840 = vpop.permute.xlu0 %1839
    %1842 = vset.pattern.permute.xlu0 7
    %1843 = vperm.xlu0 %1842, %v1005
    %v1844 = vpop.permute.xlu0 %1843
    %1846 = vset.pattern.permute.xlu0 7
    %1847 = vperm.xlu0 %1846, %v1006
    %v1848 = vpop.permute.xlu0 %1847
    %1850 = vset.pattern.permute.xlu0 7
    %1851 = vperm.xlu0 %1850, %v1007
    %v1852 = vpop.permute.xlu0 %1851
    %1854 = vset.pattern.permute.xlu0 7
    %1855 = vperm.xlu0 %1854, %v1008
    %v1856 = vpop.permute.xlu0 %1855
    %1858 = vset.pattern.permute.xlu0 7
    %1859 = vperm.xlu0 %1858, %v1009
    %v1860 = vpop.permute.xlu0 %1859
    %v1862 = vmul.f32 %v1816, %v940
    %v1863 = vmul.f32 %v1820, %v945
    %v1864 = vmul.f32 %v1824, %v950
    %v1865 = vmul.f32 %v1828, %v955
    %v1866 = vmul.f32 %v1832, %v960
    %v1867 = vmul.f32 %v1836, %v965
    %v1868 = vmul.f32 %v1840, %v970
    %v1869 = vmul.f32 %v1844, %v975
    %v1870 = vmul.f32 %v1848, %v980
    %v1871 = vmul.f32 %v1852, %v985
    %v1872 = vmul.f32 %v1856, %v990
    %v1873 = vmul.f32 %v1860, %v995
    %1886 = vrot.lane.b32.xlu0 %v1862, 121
    %v1887 = vpop.permute.xlu0 %1886
    %1888 = vrot.lane.b32.xlu0 %v1863, 121
    %v1889 = vpop.permute.xlu0 %1888
    %1890 = vrot.lane.b32.xlu0 %v1864, 121
    %v1891 = vpop.permute.xlu0 %1890
    %1892 = vrot.lane.b32.xlu0 %v1865, 121
    %v1893 = vpop.permute.xlu0 %1892
    %1894 = vrot.lane.b32.xlu0 %v1866, 121
    %v1895 = vpop.permute.xlu0 %1894
    %1896 = vrot.lane.b32.xlu0 %v1867, 121
    %v1897 = vpop.permute.xlu0 %1896
    %1898 = vrot.lane.b32.xlu0 %v1868, 121
    %v1899 = vpop.permute.xlu0 %1898
    %1900 = vrot.lane.b32.xlu0 %v1869, 121
    %v1901 = vpop.permute.xlu0 %1900
    %1902 = vrot.lane.b32.xlu0 %v1870, 121
    %v1903 = vpop.permute.xlu0 %1902
    %1904 = vrot.lane.b32.xlu0 %v1871, 121
    %v1905 = vpop.permute.xlu0 %1904
    %1906 = vrot.lane.b32.xlu0 %v1872, 121
    %v1907 = vpop.permute.xlu0 %1906
    %1908 = vrot.lane.b32.xlu0 %v1873, 121
    %v1909 = vpop.permute.xlu0 %1908
    %v1922 = vadd.f32 %v1802, %v1887
    %v1923 = vadd.f32 %v1803, %v1889
    %v1924 = vadd.f32 %v1804, %v1891
    %v1925 = vadd.f32 %v1805, %v1893
    %v1926 = vadd.f32 %v1806, %v1895
    %v1927 = vadd.f32 %v1807, %v1897
    %v1928 = vadd.f32 %v1808, %v1899
    %v1929 = vadd.f32 %v1809, %v1901
    %v1930 = vadd.f32 %v1810, %v1903
    %v1931 = vadd.f32 %v1811, %v1905
    %v1932 = vadd.f32 %v1812, %v1907
    %v1933 = vadd.f32 %v1813, %v1909
    %v1934 = vld [vmem:[%s6] sm:$0xff]
    %v1935 = vld [vmem:[%s6 + $0x8] sm:$0xff]
    %v1936 = vld [vmem:[%s6 + $0x10] sm:$0xff]
    %v1937 = vld [vmem:[%s6 + $0x18] sm:$0xff]
    %v1938 = vld [vmem:[%s6 + $0x20] sm:$0xff]
    %v1939 = vld [vmem:[%s6 + $0x28] sm:$0xff]
    %v1940 = vld [vmem:[%s6 + $0x30] sm:$0xff]
    %v1941 = vld [vmem:[%s6 + $0x38] sm:$0xff]
    %v1942 = vld [vmem:[%s6 + $0x40] sm:$0xff]
    %v1943 = vld [vmem:[%s6 + $0x48] sm:$0xff]
    %v1944 = vld [vmem:[%s6 + $0x50] sm:$0xff]
    %v1945 = vld [vmem:[%s6 + $0x58] sm:$0xff]
    %1947 = vset.pattern.permute.xlu0 0
    %1948 = vperm.xlu0 %1947, %v1934
    %v1949 = vpop.permute.xlu0 %1948
    %1952 = vset.pattern.permute.xlu0 0
    %1953 = vperm.xlu0 %1952, %v1935
    %v1954 = vpop.permute.xlu0 %1953
    %1957 = vset.pattern.permute.xlu0 0
    %1958 = vperm.xlu0 %1957, %v1936
    %v1959 = vpop.permute.xlu0 %1958
    %1962 = vset.pattern.permute.xlu0 0
    %1963 = vperm.xlu0 %1962, %v1937
    %v1964 = vpop.permute.xlu0 %1963
    %1967 = vset.pattern.permute.xlu0 0
    %1968 = vperm.xlu0 %1967, %v1938
    %v1969 = vpop.permute.xlu0 %1968
    %1972 = vset.pattern.permute.xlu0 0
    %1973 = vperm.xlu0 %1972, %v1939
    %v1974 = vpop.permute.xlu0 %1973
    %1977 = vset.pattern.permute.xlu0 0
    %1978 = vperm.xlu0 %1977, %v1940
    %v1979 = vpop.permute.xlu0 %1978
    %1982 = vset.pattern.permute.xlu0 0
    %1983 = vperm.xlu0 %1982, %v1941
    %v1984 = vpop.permute.xlu0 %1983
    %1987 = vset.pattern.permute.xlu0 0
    %1988 = vperm.xlu0 %1987, %v1942
    %v1989 = vpop.permute.xlu0 %1988
    %1992 = vset.pattern.permute.xlu0 0
    %1993 = vperm.xlu0 %1992, %v1943
    %v1994 = vpop.permute.xlu0 %1993
    %1997 = vset.pattern.permute.xlu0 0
    %1998 = vperm.xlu0 %1997, %v1944
    %v1999 = vpop.permute.xlu0 %1998
    %2002 = vset.pattern.permute.xlu0 0
    %2003 = vperm.xlu0 %2002, %v1945
    %v2004 = vpop.permute.xlu0 %2003
    %v2006 = vadd.f32 %v1922, %v1949
    %v2007 = vadd.f32 %v1923, %v1954
    %v2008 = vadd.f32 %v1924, %v1959
    %v2009 = vadd.f32 %v1925, %v1964
    %v2010 = vadd.f32 %v1926, %v1969
    %v2011 = vadd.f32 %v1927, %v1974
    %v2012 = vadd.f32 %v1928, %v1979
    %v2013 = vadd.f32 %v1929, %v1984
    %v2014 = vadd.f32 %v1930, %v1989
    %v2015 = vadd.f32 %v1931, %v1994
    %v2016 = vadd.f32 %v1932, %v1999
    %v2017 = vadd.f32 %v1933, %v2004
    %v2018 = vld [vmem:[%s7] sm:$0xff]
    %v2019 = vld [vmem:[%s7 + $0x8] sm:$0xff]
    %v2020 = vld [vmem:[%s7 + $0x10] sm:$0xff]
    %v2021 = vld [vmem:[%s7 + $0x18] sm:$0xff]
    %v2022 = vld [vmem:[%s7 + $0x20] sm:$0xff]
    %v2023 = vld [vmem:[%s7 + $0x28] sm:$0xff]
    %v2024 = vld [vmem:[%s7 + $0x30] sm:$0xff]
    %v2025 = vld [vmem:[%s7 + $0x38] sm:$0xff]
    %v2026 = vld [vmem:[%s7 + $0x40] sm:$0xff]
    %v2027 = vld [vmem:[%s7 + $0x48] sm:$0xff]
    %v2028 = vld [vmem:[%s7 + $0x50] sm:$0xff]
    %v2029 = vld [vmem:[%s7 + $0x58] sm:$0xff]
    %v2030 = vld [vmem:[%s8] sm:$0xff]
    %v2031 = vld [vmem:[%s8 + $0x8] sm:$0xff]
    %v2032 = vld [vmem:[%s8 + $0x10] sm:$0xff]
    %v2033 = vld [vmem:[%s8 + $0x18] sm:$0xff]
    %v2034 = vld [vmem:[%s8 + $0x20] sm:$0xff]
    %v2035 = vld [vmem:[%s8 + $0x28] sm:$0xff]
    %v2036 = vld [vmem:[%s8 + $0x30] sm:$0xff]
    %v2037 = vld [vmem:[%s8 + $0x38] sm:$0xff]
    %v2038 = vld [vmem:[%s8 + $0x40] sm:$0xff]
    %v2039 = vld [vmem:[%s8 + $0x48] sm:$0xff]
    %v2040 = vld [vmem:[%s8 + $0x50] sm:$0xff]
    %v2041 = vld [vmem:[%s8 + $0x58] sm:$0xff]
    %2043 = vset.pattern.permute.xlu0 0
    %2044 = vperm.xlu0 %2043, %v2030
    %v2045 = vpop.permute.xlu0 %2044
    %2048 = vset.pattern.permute.xlu0 0
    %2049 = vperm.xlu0 %2048, %v2031
    %v2050 = vpop.permute.xlu0 %2049
    %2053 = vset.pattern.permute.xlu0 0
    %2054 = vperm.xlu0 %2053, %v2032
    %v2055 = vpop.permute.xlu0 %2054
    %2058 = vset.pattern.permute.xlu0 0
    %2059 = vperm.xlu0 %2058, %v2033
    %v2060 = vpop.permute.xlu0 %2059
    %2063 = vset.pattern.permute.xlu0 0
    %2064 = vperm.xlu0 %2063, %v2034
    %v2065 = vpop.permute.xlu0 %2064
    %2068 = vset.pattern.permute.xlu0 0
    %2069 = vperm.xlu0 %2068, %v2035
    %v2070 = vpop.permute.xlu0 %2069
    %2073 = vset.pattern.permute.xlu0 0
    %2074 = vperm.xlu0 %2073, %v2036
    %v2075 = vpop.permute.xlu0 %2074
    %2078 = vset.pattern.permute.xlu0 0
    %2079 = vperm.xlu0 %2078, %v2037
    %v2080 = vpop.permute.xlu0 %2079
    %2083 = vset.pattern.permute.xlu0 0
    %2084 = vperm.xlu0 %2083, %v2038
    %v2085 = vpop.permute.xlu0 %2084
    %2088 = vset.pattern.permute.xlu0 0
    %2089 = vperm.xlu0 %2088, %v2039
    %v2090 = vpop.permute.xlu0 %2089
    %2093 = vset.pattern.permute.xlu0 0
    %2094 = vperm.xlu0 %2093, %v2040
    %v2095 = vpop.permute.xlu0 %2094
    %2098 = vset.pattern.permute.xlu0 0
    %2099 = vperm.xlu0 %2098, %v2041
    %v2100 = vpop.permute.xlu0 %2099
    %vm2102 = vcmask 785408
    %v2104 = vsel %vm2102, %v2018, 0
    %v2107 = vsel %vm2102, %v2019, 0
    %v2110 = vsel %vm2102, %v2020, 0
    %v2113 = vsel %vm2102, %v2021, 0
    %v2116 = vsel %vm2102, %v2022, 0
    %v2119 = vsel %vm2102, %v2023, 0
    %v2122 = vsel %vm2102, %v2024, 0
    %v2125 = vsel %vm2102, %v2025, 0
    %v2128 = vsel %vm2102, %v2026, 0
    %v2131 = vsel %vm2102, %v2027, 0
    %v2134 = vsel %vm2102, %v2028, 0
    %v2137 = vsel %vm2102, %v2029, 0
    %2139 = vmatprep.subr.mxu0 0.0
    %2140 = vmatpush1.msra.mxu0 %v2006
    %2141 = vmatprep.subr.mxu0 0.0
    %2142 = vmatpush1.msra.mxu0 %v2007
    %2143 = vmatprep.subr.mxu0 0.0
    %2144 = vmatpush1.msra.mxu0 %v2008
    %2145 = vmatprep.subr.mxu0 0.0
    %2146 = vmatpush1.msra.mxu0 %v2009
    %2147 = vmatprep.subr.mxu0 0.0
    %2148 = vmatpush1.msra.mxu0 %v2010
    %2149 = vmatprep.subr.mxu0 0.0
    %2150 = vmatpush1.msra.mxu0 %v2011
    %2151 = vmatprep.subr.mxu0 0.0
    %2152 = vmatpush1.msra.mxu0 %v2012
    %2153 = vmatprep.subr.mxu0 0.0
    %2154 = vmatpush1.msra.mxu0 %v2013
    %2155 = vmatprep.subr.mxu0 0.0
    %2156 = vmatpush1.msra.mxu0 %v2014
    %2157 = vmatprep.subr.mxu0 0.0
    %2158 = vmatpush1.msra.mxu0 %v2015
    %2159 = vmatprep.subr.mxu0 0.0
    %2160 = vmatpush1.msra.mxu0 %v2016
    %2161 = vmatprep.subr.mxu0 0.0
    %2162 = vmatpush1.msra.mxu0 %v2017
    %2163 = vmatprep.subr.mxu0 0.0
    %2164 = vmatpush1.msra.mxu0 0.0
    %2165 = vmatprep.subr.mxu0 0.0
    %2166 = vmatpush1.msra.mxu0 0.0
    %2167 = vmatprep.subr.mxu0 0.0
    %2168 = vmatpush1.msra.mxu0 0.0
    %2169 = vmatprep.subr.mxu0 0.0
    %2170 = vmatpush1.msra.mxu0 0.0
    %2171 = vmatprep.subr.mxu0 0.0
    %2172 = vmatpush1.msra.mxu0 0.0
    %2173 = vmatprep.subr.mxu0 0.0
    %2174 = vmatpush1.msra.mxu0 0.0
    %2175 = vmatprep.subr.mxu0 0.0
    %2176 = vmatpush1.msra.mxu0 0.0
    %2177 = vmatprep.subr.mxu0 0.0
    %2178 = vmatpush1.msra.mxu0 0.0
    %2179 = vmatprep.subr.mxu0 0.0
    %2180 = vmatpush1.msra.mxu0 0.0
    %2181 = vmatprep.subr.mxu0 0.0
    %2182 = vmatpush1.msra.mxu0 0.0
    %2183 = vmatprep.subr.mxu0 0.0
    %2184 = vmatpush1.msra.mxu0 0.0
    %2185 = vmatprep.subr.mxu0 0.0
    %2186 = vmatpush1.msra.mxu0 0.0
    %2187 = vmatprep.subr.mxu0 0.0
    %2188 = vmatpush1.msra.mxu0 0.0
    %2189 = vmatprep.subr.mxu0 0.0
    %2190 = vmatpush1.msra.mxu0 0.0
    %2191 = vmatprep.subr.mxu0 0.0
    %2192 = vmatpush1.msra.mxu0 0.0
    %2193 = vmatprep.subr.mxu0 0.0
    %2194 = vmatpush1.msra.mxu0 0.0
    %2195 = vmatprep.subr.mxu0 0.0
    %2196 = vmatpush1.msra.mxu0 0.0
    %2197 = vmatprep.subr.mxu0 0.0
    %2198 = vmatpush1.msra.mxu0 0.0
    %2199 = vmatprep.subr.mxu0 0.0
    %2200 = vmatpush1.msra.mxu0 0.0
    %2201 = vmatprep.subr.mxu0 0.0
    %2202 = vmatpush1.msra.mxu0 0.0
    %2203 = vmatprep.mubr.f32.mxu0 0.0
    %2204 = vmatmul.mubr.f32.gmra.mrb[0].mxu0 %v2104
    %v2205 = vpop.f32.mrb[0].mxu0
    %v2206 = vadd.f32 %v2045, %v2205
    %v2207 = vpop.f32.mrb[0].mxu0
    %2208 = vmatprep.mubr.f32.mxu0 0.0
    %2209 = vmatmul.mubr.f32.gmra.mrb[0].mxu0 %v2107
    %v2210 = vpop.f32.mrb[0].mxu0
    %v2211 = vadd.f32 %v2050, %v2210
    %v2212 = vpop.f32.mrb[0].mxu0
    %2213 = vmatprep.mubr.f32.mxu0 0.0
    %2214 = vmatmul.mubr.f32.gmra.mrb[0].mxu0 %v2110
    %v2215 = vpop.f32.mrb[0].mxu0
    %v2216 = vadd.f32 %v2055, %v2215
    %v2217 = vpop.f32.mrb[0].mxu0
    %2218 = vmatprep.mubr.f32.mxu0 0.0
    %2219 = vmatmul.mubr.f32.gmra.mrb[0].mxu0 %v2113
    %v2220 = vpop.f32.mrb[0].mxu0
    %v2221 = vadd.f32 %v2060, %v2220
    %v2222 = vpop.f32.mrb[0].mxu0
    %2223 = vmatprep.mubr.f32.mxu0 0.0
    %2224 = vmatmul.mubr.f32.gmra.mrb[0].mxu0 %v2116
    %v2225 = vpop.f32.mrb[0].mxu0
    %v2226 = vadd.f32 %v2065, %v2225
    %v2227 = vpop.f32.mrb[0].mxu0
    %2228 = vmatprep.mubr.f32.mxu0 0.0
    %2229 = vmatmul.mubr.f32.gmra.mrb[0].mxu0 %v2119
    %v2230 = vpop.f32.mrb[0].mxu0
    %v2231 = vadd.f32 %v2070, %v2230
    %v2232 = vpop.f32.mrb[0].mxu0
    %2233 = vmatprep.mubr.f32.mxu0 0.0
    %2234 = vmatmul.mubr.f32.gmra.mrb[0].mxu0 %v2122
    %v2235 = vpop.f32.mrb[0].mxu0
    %v2236 = vadd.f32 %v2075, %v2235
    %v2237 = vpop.f32.mrb[0].mxu0
    %2238 = vmatprep.mubr.f32.mxu0 0.0
    %2239 = vmatmul.mubr.f32.gmra.mrb[0].mxu0 %v2125
    %v2240 = vpop.f32.mrb[0].mxu0
    %v2241 = vadd.f32 %v2080, %v2240
    %v2242 = vpop.f32.mrb[0].mxu0
    %2243 = vmatprep.mubr.f32.mxu0 0.0
    %2244 = vmatmul.mubr.f32.gmra.mrb[0].mxu0 %v2128
    %v2245 = vpop.f32.mrb[0].mxu0
    %v2246 = vadd.f32 %v2085, %v2245
    %v2247 = vpop.f32.mrb[0].mxu0
    %2248 = vmatprep.mubr.f32.mxu0 0.0
    %2249 = vmatmul.mubr.f32.gmra.mrb[0].mxu0 %v2131
    %v2250 = vpop.f32.mrb[0].mxu0
    %v2251 = vadd.f32 %v2090, %v2250
    %v2252 = vpop.f32.mrb[0].mxu0
    %2253 = vmatprep.mubr.f32.mxu0 0.0
    %2254 = vmatmul.mubr.f32.gmra.mrb[0].mxu0 %v2134
    %v2255 = vpop.f32.mrb[0].mxu0
    %v2256 = vadd.f32 %v2095, %v2255
    %v2257 = vpop.f32.mrb[0].mxu0
    %2258 = vmatprep.mubr.f32.mxu0 0.0
    %2259 = vmatmul.mubr.f32.gmra.mrb[0].mxu0 %v2137
    %v2260 = vpop.f32.mrb[0].mxu0
    %v2261 = vadd.f32 %v2100, %v2260
    %v2262 = vpop.f32.mrb[0].mxu0
    %2263 = vdwg.mxu0
    %vm2264 = vcmp.gt.f32.partialorder %v2206, 0.0
    %vm2265 = vcmp.gt.f32.partialorder %v2211, 0.0
    %vm2266 = vcmp.gt.f32.partialorder %v2216, 0.0
    %vm2267 = vcmp.gt.f32.partialorder %v2221, 0.0
    %vm2268 = vcmp.gt.f32.partialorder %v2226, 0.0
    %vm2269 = vcmp.gt.f32.partialorder %v2231, 0.0
    %vm2270 = vcmp.gt.f32.partialorder %v2236, 0.0
    %vm2271 = vcmp.gt.f32.partialorder %v2241, 0.0
    %vm2272 = vcmp.gt.f32.partialorder %v2246, 0.0
    %vm2273 = vcmp.gt.f32.partialorder %v2251, 0.0
    %vm2274 = vcmp.gt.f32.partialorder %v2256, 0.0
    %vm2275 = vcmp.gt.f32.partialorder %v2261, 0.0
    %v2276 = vmin.f32 %v2206, 0.0
    %v2277 = vmin.f32 %v2211, 0.0
    %v2278 = vmin.f32 %v2216, 0.0
    %v2279 = vmin.f32 %v2221, 0.0
    %v2280 = vmin.f32 %v2226, 0.0
    %v2281 = vmin.f32 %v2231, 0.0
    %v2282 = vmin.f32 %v2236, 0.0
    %v2283 = vmin.f32 %v2241, 0.0
    %v2284 = vmin.f32 %v2246, 0.0
    %v2285 = vmin.f32 %v2251, 0.0
    %v2286 = vmin.f32 %v2256, 0.0
    %v2287 = vmin.f32 %v2261, 0.0
    %v2288 = vmul.f32 %v2276, 1.442695
    %v2289 = vpow.pop %v2288
    %v2290 = vmul.f32 %v2277, 1.442695
    %v2291 = vpow.pop %v2290
    %v2292 = vmul.f32 %v2278, 1.442695
    %v2293 = vpow.pop %v2292
    %v2294 = vmul.f32 %v2279, 1.442695
    %v2295 = vpow.pop %v2294
    %v2296 = vmul.f32 %v2280, 1.442695
    %v2297 = vpow.pop %v2296
    %v2298 = vmul.f32 %v2281, 1.442695
    %v2299 = vpow.pop %v2298
    %v2300 = vmul.f32 %v2282, 1.442695
    %v2301 = vpow.pop %v2300
    %v2302 = vmul.f32 %v2283, 1.442695
    %v2303 = vpow.pop %v2302
    %v2304 = vmul.f32 %v2284, 1.442695
    %v2305 = vpow.pop %v2304
    %v2306 = vmul.f32 %v2285, 1.442695
    %v2307 = vpow.pop %v2306
    %v2308 = vmul.f32 %v2286, 1.442695
    %v2309 = vpow.pop %v2308
    %v2310 = vmul.f32 %v2287, 1.442695
    %v2311 = vpow.pop %v2310
    %v2312 = vsub.f32 %v2289, 1.0
    %v2313 = vsub.f32 %v2291, 1.0
    %v2314 = vsub.f32 %v2293, 1.0
    %v2315 = vsub.f32 %v2295, 1.0
    %v2316 = vsub.f32 %v2297, 1.0
    %v2317 = vsub.f32 %v2299, 1.0
    %v2318 = vsub.f32 %v2301, 1.0
    %v2319 = vsub.f32 %v2303, 1.0
    %v2320 = vsub.f32 %v2305, 1.0
    %v2321 = vsub.f32 %v2307, 1.0
    %v2322 = vsub.f32 %v2309, 1.0
    %v2323 = vsub.f32 %v2311, 1.0
    %v2324 = vsel %vm2264, %v2206, %v2312
    %v2325 = vsel %vm2265, %v2211, %v2313
    %v2326 = vsel %vm2266, %v2216, %v2314
    %v2327 = vsel %vm2267, %v2221, %v2315
    %v2328 = vsel %vm2268, %v2226, %v2316
    %v2329 = vsel %vm2269, %v2231, %v2317
    %v2330 = vsel %vm2270, %v2236, %v2318
    %v2331 = vsel %vm2271, %v2241, %v2319
    %v2332 = vsel %vm2272, %v2246, %v2320
    %v2333 = vsel %vm2273, %v2251, %v2321
    %v2334 = vsel %vm2274, %v2256, %v2322
    %v2335 = vsel %vm2275, %v2261, %v2323
    %v2336 = vld [vmem:[%s9] sm:$0xff]
    %v2337 = vld [vmem:[%s9 + $0x8] sm:$0xff]
    %v2338 = vld [vmem:[%s9 + $0x10] sm:$0xff]
    %v2339 = vld [vmem:[%s9 + $0x18] sm:$0xff]
    %v2340 = vld [vmem:[%s9 + $0x20] sm:$0xff]
    %v2341 = vld [vmem:[%s9 + $0x28] sm:$0xff]
    %v2342 = vld [vmem:[%s9 + $0x30] sm:$0xff]
    %v2343 = vld [vmem:[%s9 + $0x38] sm:$0xff]
    %v2344 = vld [vmem:[%s9 + $0x40] sm:$0xff]
    %v2345 = vld [vmem:[%s9 + $0x48] sm:$0xff]
    %v2346 = vld [vmem:[%s9 + $0x50] sm:$0xff]
    %v2347 = vld [vmem:[%s9 + $0x58] sm:$0xff]
    %v2348 = vmul.f32 %v2324, %v2336
    %v2349 = vmul.f32 %v2325, %v2337
    %v2350 = vmul.f32 %v2326, %v2338
    %v2351 = vmul.f32 %v2327, %v2339
    %v2352 = vmul.f32 %v2328, %v2340
    %v2353 = vmul.f32 %v2329, %v2341
    %v2354 = vmul.f32 %v2330, %v2342
    %v2355 = vmul.f32 %v2331, %v2343
    %v2356 = vmul.f32 %v2332, %v2344
    %v2357 = vmul.f32 %v2333, %v2345
    %v2358 = vmul.f32 %v2334, %v2346
    %v2359 = vmul.f32 %v2335, %v2347
    %vm2360 = vcmask 72704
    %v2361 = vsel %vm2360, %v2348, 0.0
    %2362 = vadd.xlane.f32.xlu0 %v2361
    %v2363 = vpop.xlane.xlu0 %2362
    %v2364 = vsel %vm2360, %v2349, 0.0
    %2365 = vadd.xlane.f32.xlu0 %v2364
    %v2366 = vpop.xlane.xlu0 %2365
    %v2367 = vsel %vm2360, %v2350, 0.0
    %2368 = vadd.xlane.f32.xlu0 %v2367
    %v2369 = vpop.xlane.xlu0 %2368
    %v2370 = vsel %vm2360, %v2351, 0.0
    %2371 = vadd.xlane.f32.xlu0 %v2370
    %v2372 = vpop.xlane.xlu0 %2371
    %v2373 = vsel %vm2360, %v2352, 0.0
    %2374 = vadd.xlane.f32.xlu0 %v2373
    %v2375 = vpop.xlane.xlu0 %2374
    %v2376 = vsel %vm2360, %v2353, 0.0
    %2377 = vadd.xlane.f32.xlu0 %v2376
    %v2378 = vpop.xlane.xlu0 %2377
    %v2379 = vsel %vm2360, %v2354, 0.0
    %2380 = vadd.xlane.f32.xlu0 %v2379
    %v2381 = vpop.xlane.xlu0 %2380
    %v2382 = vsel %vm2360, %v2355, 0.0
    %2383 = vadd.xlane.f32.xlu0 %v2382
    %v2384 = vpop.xlane.xlu0 %2383
    %v2385 = vsel %vm2360, %v2356, 0.0
    %2386 = vadd.xlane.f32.xlu0 %v2385
    %v2387 = vpop.xlane.xlu0 %2386
    %v2388 = vsel %vm2360, %v2357, 0.0
    %2389 = vadd.xlane.f32.xlu0 %v2388
    %v2390 = vpop.xlane.xlu0 %2389
    %v2391 = vsel %vm2360, %v2358, 0.0
    %2392 = vadd.xlane.f32.xlu0 %v2391
    %v2393 = vpop.xlane.xlu0 %2392
    %v2394 = vsel %vm2360, %v2359, 0.0
    %2395 = vadd.xlane.f32.xlu0 %v2394
    %v2396 = vpop.xlane.xlu0 %2395
    %s2397 = scalar_lea.vmem %s9, 96
    %v2398 = vld [vmem:[%s2397] sm:$0xff]
    %v2399 = vld [vmem:[%s2397 + $0x8] sm:$0xff]
    %v2400 = vld [vmem:[%s2397 + $0x10] sm:$0xff]
    %v2401 = vld [vmem:[%s2397 + $0x18] sm:$0xff]
    %v2402 = vld [vmem:[%s2397 + $0x20] sm:$0xff]
    %v2403 = vld [vmem:[%s2397 + $0x28] sm:$0xff]
    %v2404 = vld [vmem:[%s2397 + $0x30] sm:$0xff]
    %v2405 = vld [vmem:[%s2397 + $0x38] sm:$0xff]
    %v2406 = vld [vmem:[%s2397 + $0x40] sm:$0xff]
    %v2407 = vld [vmem:[%s2397 + $0x48] sm:$0xff]
    %v2408 = vld [vmem:[%s2397 + $0x50] sm:$0xff]
    %v2409 = vld [vmem:[%s2397 + $0x58] sm:$0xff]
    %v2410 = vmul.f32 %v2324, %v2398
    %v2411 = vmul.f32 %v2325, %v2399
    %v2412 = vmul.f32 %v2326, %v2400
    %v2413 = vmul.f32 %v2327, %v2401
    %v2414 = vmul.f32 %v2328, %v2402
    %v2415 = vmul.f32 %v2329, %v2403
    %v2416 = vmul.f32 %v2330, %v2404
    %v2417 = vmul.f32 %v2331, %v2405
    %v2418 = vmul.f32 %v2332, %v2406
    %v2419 = vmul.f32 %v2333, %v2407
    %v2420 = vmul.f32 %v2334, %v2408
    %v2421 = vmul.f32 %v2335, %v2409
    %v2422 = vsel %vm2360, %v2410, 0.0
    %2423 = vadd.xlane.f32.xlu0 %v2422
    %v2424 = vpop.xlane.xlu0 %2423
    %v2425 = vsel %vm2360, %v2411, 0.0
    %2426 = vadd.xlane.f32.xlu0 %v2425
    %v2427 = vpop.xlane.xlu0 %2426
    %v2428 = vsel %vm2360, %v2412, 0.0
    %2429 = vadd.xlane.f32.xlu0 %v2428
    %v2430 = vpop.xlane.xlu0 %2429
    %v2431 = vsel %vm2360, %v2413, 0.0
    %2432 = vadd.xlane.f32.xlu0 %v2431
    %v2433 = vpop.xlane.xlu0 %2432
    %v2434 = vsel %vm2360, %v2414, 0.0
    %2435 = vadd.xlane.f32.xlu0 %v2434
    %v2436 = vpop.xlane.xlu0 %2435
    %v2437 = vsel %vm2360, %v2415, 0.0
    %2438 = vadd.xlane.f32.xlu0 %v2437
    %v2439 = vpop.xlane.xlu0 %2438
    %v2440 = vsel %vm2360, %v2416, 0.0
    %2441 = vadd.xlane.f32.xlu0 %v2440
    %v2442 = vpop.xlane.xlu0 %2441
    %v2443 = vsel %vm2360, %v2417, 0.0
    %2444 = vadd.xlane.f32.xlu0 %v2443
    %v2445 = vpop.xlane.xlu0 %2444
    %v2446 = vsel %vm2360, %v2418, 0.0
    %2447 = vadd.xlane.f32.xlu0 %v2446
    %v2448 = vpop.xlane.xlu0 %2447
    %v2449 = vsel %vm2360, %v2419, 0.0
    %2450 = vadd.xlane.f32.xlu0 %v2449
    %v2451 = vpop.xlane.xlu0 %2450
    %v2452 = vsel %vm2360, %v2420, 0.0
    %2453 = vadd.xlane.f32.xlu0 %v2452
    %v2454 = vpop.xlane.xlu0 %2453
    %v2455 = vsel %vm2360, %v2421, 0.0
    %2456 = vadd.xlane.f32.xlu0 %v2455
    %v2457 = vpop.xlane.xlu0 %2456
    %s2458 = scalar_lea.vmem %s9, 192
    %v2459 = vld [vmem:[%s2458] sm:$0xff]
    %v2460 = vld [vmem:[%s2458 + $0x8] sm:$0xff]
    %v2461 = vld [vmem:[%s2458 + $0x10] sm:$0xff]
    %v2462 = vld [vmem:[%s2458 + $0x18] sm:$0xff]
    %v2463 = vld [vmem:[%s2458 + $0x20] sm:$0xff]
    %v2464 = vld [vmem:[%s2458 + $0x28] sm:$0xff]
    %v2465 = vld [vmem:[%s2458 + $0x30] sm:$0xff]
    %v2466 = vld [vmem:[%s2458 + $0x38] sm:$0xff]
    %v2467 = vld [vmem:[%s2458 + $0x40] sm:$0xff]
    %v2468 = vld [vmem:[%s2458 + $0x48] sm:$0xff]
    %v2469 = vld [vmem:[%s2458 + $0x50] sm:$0xff]
    %v2470 = vld [vmem:[%s2458 + $0x58] sm:$0xff]
    %v2471 = vmul.f32 %v2324, %v2459
    %v2472 = vmul.f32 %v2325, %v2460
    %v2473 = vmul.f32 %v2326, %v2461
    %v2474 = vmul.f32 %v2327, %v2462
    %v2475 = vmul.f32 %v2328, %v2463
    %v2476 = vmul.f32 %v2329, %v2464
    %v2477 = vmul.f32 %v2330, %v2465
    %v2478 = vmul.f32 %v2331, %v2466
    %v2479 = vmul.f32 %v2332, %v2467
    %v2480 = vmul.f32 %v2333, %v2468
    %v2481 = vmul.f32 %v2334, %v2469
    %v2482 = vmul.f32 %v2335, %v2470
    %v2483 = vsel %vm2360, %v2471, 0.0
    %2484 = vadd.xlane.f32.xlu0 %v2483
    %v2485 = vpop.xlane.xlu0 %2484
    %v2486 = vsel %vm2360, %v2472, 0.0
    %2487 = vadd.xlane.f32.xlu0 %v2486
    %v2488 = vpop.xlane.xlu0 %2487
    %v2489 = vsel %vm2360, %v2473, 0.0
    %2490 = vadd.xlane.f32.xlu0 %v2489
    %v2491 = vpop.xlane.xlu0 %2490
    %v2492 = vsel %vm2360, %v2474, 0.0
    %2493 = vadd.xlane.f32.xlu0 %v2492
    %v2494 = vpop.xlane.xlu0 %2493
    %v2495 = vsel %vm2360, %v2475, 0.0
    %2496 = vadd.xlane.f32.xlu0 %v2495
    %v2497 = vpop.xlane.xlu0 %2496
    %v2498 = vsel %vm2360, %v2476, 0.0
    %2499 = vadd.xlane.f32.xlu0 %v2498
    %v2500 = vpop.xlane.xlu0 %2499
    %v2501 = vsel %vm2360, %v2477, 0.0
    %2502 = vadd.xlane.f32.xlu0 %v2501
    %v2503 = vpop.xlane.xlu0 %2502
    %v2504 = vsel %vm2360, %v2478, 0.0
    %2505 = vadd.xlane.f32.xlu0 %v2504
    %v2506 = vpop.xlane.xlu0 %2505
    %v2507 = vsel %vm2360, %v2479, 0.0
    %2508 = vadd.xlane.f32.xlu0 %v2507
    %v2509 = vpop.xlane.xlu0 %2508
    %v2510 = vsel %vm2360, %v2480, 0.0
    %2511 = vadd.xlane.f32.xlu0 %v2510
    %v2512 = vpop.xlane.xlu0 %2511
    %v2513 = vsel %vm2360, %v2481, 0.0
    %2514 = vadd.xlane.f32.xlu0 %v2513
    %v2515 = vpop.xlane.xlu0 %2514
    %v2516 = vsel %vm2360, %v2482, 0.0
    %2517 = vadd.xlane.f32.xlu0 %v2516
    %v2518 = vpop.xlane.xlu0 %2517
    %vm2519 = vcmask 7168
    %v2520 = vsel %vm2519, %v2363, %v2424
    %v2521 = vsel %vm2519, %v2366, %v2427
    %v2522 = vsel %vm2519, %v2369, %v2430
    %v2523 = vsel %vm2519, %v2372, %v2433
    %v2524 = vsel %vm2519, %v2375, %v2436
    %v2525 = vsel %vm2519, %v2378, %v2439
    %v2526 = vsel %vm2519, %v2381, %v2442
    %v2527 = vsel %vm2519, %v2384, %v2445
    %v2528 = vsel %vm2519, %v2387, %v2448
    %v2529 = vsel %vm2519, %v2390, %v2451
    %v2530 = vsel %vm2519, %v2393, %v2454
    %v2531 = vsel %vm2519, %v2396, %v2457
    %vm2532 = vcmask 15360
    %v2533 = vsel %vm2532, %v2520, %v2485
    %v2534 = vsel %vm2532, %v2521, %v2488
    %v2535 = vsel %vm2532, %v2522, %v2491
    %v2536 = vsel %vm2532, %v2523, %v2494
    %v2537 = vsel %vm2532, %v2524, %v2497
    %v2538 = vsel %vm2532, %v2525, %v2500
    %v2539 = vsel %vm2532, %v2526, %v2503
    %v2540 = vsel %vm2532, %v2527, %v2506
    %v2541 = vsel %vm2532, %v2528, %v2509
    %v2542 = vsel %vm2532, %v2529, %v2512
    %v2543 = vsel %vm2532, %v2530, %v2515
    %v2544 = vsel %vm2532, %v2531, %v2518
    %v2545 = vld [vmem:[%s10] sm:$0xff]
    %v2546 = vld [vmem:[%s11] sm:$0x1]
    %v2548 = vlaneseq
    %v2549 = vshrl.u32 %v2548, 7
    %v2550 = vsub.s32 0, %v2549
    %v2551 = vrot.slane %v2546, %v2550
    %v2554 = vsel %vm2102, %v2545, 0
    %2556 = vmatprep.subr.mxu0 0.0
    %2557 = vmatpush1.msra.mxu0 %v2533
    %2558 = vmatprep.subr.mxu0 0.0
    %2559 = vmatpush1.msra.mxu0 %v2534
    %2560 = vmatprep.subr.mxu0 0.0
    %2561 = vmatpush1.msra.mxu0 %v2535
    %2562 = vmatprep.subr.mxu0 0.0
    %2563 = vmatpush1.msra.mxu0 %v2536
    %2564 = vmatprep.subr.mxu0 0.0
    %2565 = vmatpush1.msra.mxu0 %v2537
    %2566 = vmatprep.subr.mxu0 0.0
    %2567 = vmatpush1.msra.mxu0 %v2538
    %2568 = vmatprep.subr.mxu0 0.0
    %2569 = vmatpush1.msra.mxu0 %v2539
    %2570 = vmatprep.subr.mxu0 0.0
    %2571 = vmatpush1.msra.mxu0 %v2540
    %2572 = vmatprep.subr.mxu0 0.0
    %2573 = vmatpush1.msra.mxu0 %v2541
    %2574 = vmatprep.subr.mxu0 0.0
    %2575 = vmatpush1.msra.mxu0 %v2542
    %2576 = vmatprep.subr.mxu0 0.0
    %2577 = vmatpush1.msra.mxu0 %v2543
    %2578 = vmatprep.subr.mxu0 0.0
    %2579 = vmatpush1.msra.mxu0 %v2544
    %2580 = vmatprep.subr.mxu0 0.0
    %2581 = vmatpush1.msra.mxu0 0.0
    %2582 = vmatprep.subr.mxu0 0.0
    %2583 = vmatpush1.msra.mxu0 0.0
    %2584 = vmatprep.subr.mxu0 0.0
    %2585 = vmatpush1.msra.mxu0 0.0
    %2586 = vmatprep.subr.mxu0 0.0
    %2587 = vmatpush1.msra.mxu0 0.0
    %2588 = vmatprep.subr.mxu0 0.0
    %2589 = vmatpush1.msra.mxu0 0.0
    %2590 = vmatprep.subr.mxu0 0.0
    %2591 = vmatpush1.msra.mxu0 0.0
    %2592 = vmatprep.subr.mxu0 0.0
    %2593 = vmatpush1.msra.mxu0 0.0
    %2594 = vmatprep.subr.mxu0 0.0
    %2595 = vmatpush1.msra.mxu0 0.0
    %2596 = vmatprep.subr.mxu0 0.0
    %2597 = vmatpush1.msra.mxu0 0.0
    %2598 = vmatprep.subr.mxu0 0.0
    %2599 = vmatpush1.msra.mxu0 0.0
    %2600 = vmatprep.subr.mxu0 0.0
    %2601 = vmatpush1.msra.mxu0 0.0
    %2602 = vmatprep.subr.mxu0 0.0
    %2603 = vmatpush1.msra.mxu0 0.0
    %2604 = vmatprep.subr.mxu0 0.0
    %2605 = vmatpush1.msra.mxu0 0.0
    %2606 = vmatprep.subr.mxu0 0.0
    %2607 = vmatpush1.msra.mxu0 0.0
    %2608 = vmatprep.subr.mxu0 0.0
    %2609 = vmatpush1.msra.mxu0 0.0
    %2610 = vmatprep.subr.mxu0 0.0
    %2611 = vmatpush1.msra.mxu0 0.0
    %2612 = vmatprep.subr.mxu0 0.0
    %2613 = vmatpush1.msra.mxu0 0.0
    %2614 = vmatprep.subr.mxu0 0.0
    %2615 = vmatpush1.msra.mxu0 0.0
    %2616 = vmatprep.subr.mxu0 0.0
    %2617 = vmatpush1.msra.mxu0 0.0
    %2618 = vmatprep.subr.mxu0 0.0
    %2619 = vmatpush1.msra.mxu0 0.0
    %2620 = vmatprep.mubr.f32.mxu0 0.0
    %2621 = vmatmul.mubr.f32.gmra.mrb[0].mxu0 %v2554
    %v2622 = vpop.f32.mrb[0].mxu0
    %v2623 = vadd.f32 %v2551, %v2622
    %v2624 = vpop.f32.mrb[0].mxu0
    %2625 = vdwg.mxu0
    %vm2626 = vcmask 23552
    %v2627 = vsel %vm2626, %v2623, 0.0
    %2628 = vst [vmem:[#allocation6] sm:$0xff] %v2627
    // Predicated region
    $region54: #{tpu_custom_call.1} parent=1 // pred_check
      _
    $region55: #{tpu_custom_call.1} parent=1 // pred_check_branch
      %2630 = sbr.rel (0) target = $region57
    $region56: #{tpu_custom_call.1} parent=1 // pred_region
      %s2632 = ssub.s32 128, 128
      %2633 = vsyncadd [#allocation5], %s2632
      %s2635 = sshll.u32 [#allocation6], 4
      %s2636 = int_to_ptr.vmem [resolvable:$true] %s2635
      %2638 = dma.vmem_to_hbm [thread:$0]  %s2636, 128, %s12, [#allocation5]
    $region57: #{tpu_custom_call.1} parent=1 // pred_fallthru
      _
    // Predicated region
    $region58: #{tpu_custom_call.1} parent=1 // pred_check
      _
    $region59: #{tpu_custom_call.1} parent=1 // pred_check_branch
      %2640 = sbr.rel (0) target = $region61
    $region60: #{tpu_custom_call.1} parent=1 // pred_region
      %2641 = dma.done [#allocation5], 128
    $region61: #{tpu_custom_call.1} parent=1 // pred_fallthru
      _
    %2642 = vsyncpa [#allocation4], 1
    %2643 = vsyncpa [#allocation5], 1

</llo_original>
